<compile_context>
chip_gen: v7x
topology: tpu7x:2x2x1
jax: 0.10.0
libtpu: 0.0.40
codegen_flags: <defaults>
</compile_context>

<pallas_src>
import functools

import jax
import jax.numpy as jnp
from jax import lax
from jax.experimental import pallas as pl
from jax.experimental.pallas import tpu as pltpu


def _round_up(n, m):
    return -(-n // m) * m


def _pick_l_tile(L):
    """Largest multiple-of-8 tile of L that yields >=2 grid steps, else full L."""
    if L % 8 != 0:
        return L
    for cand in (512, 256, 128, 64, 32, 16, 8):
        if L % cand == 0 and L // cand >= 2:
            return cand
    return L


def _vmem_limit_bytes(B, Lt, D, E, Npad):
    """Conservative VMEM footprint estimate (bytes), clamped to [32 MiB, 64 MiB]."""
    f32 = 4
    e4 = 4 * E
    per_core = (
        2 * B * Lt * (D + Npad)                       # double-buffered x / out blocks
        + 2 * (D * E + E                              # input projection
               + 3 * (2 * E * e4 + e4)                # 3 layers: w_ih, w_hh, b
               + E * Npad + Npad)                     # fused head
        + B * Lt * (E + e4)                           # scratch: xbuf, xproj
    ) * f32
    est = 2 * per_core + (8 << 20)                    # headroom for (8,128) padding
    return int(min(64 << 20, max(est, 32 << 20)))


def make_lstm_model_kernel(B, Lt, D, E, Npad):
    E4 = 4 * E

    def kernel(x_ref, w_in_ref, b_in_ref,
               w_ih0, w_hh0, b0,
               w_ih1, w_hh1, b1,
               w_ih2, w_hh2, b2,
               w_head_ref, b_head_ref,
               out_ref,
               xbuf, xproj):
        # ---- input projection + ReLU (one big matmul over all B*Lt rows) ----
        x2 = x_ref[...].reshape(B * Lt, D)
        emb = jnp.dot(x2, w_in_ref[...],
                      preferred_element_type=jnp.float32) + b_in_ref[...]
        xbuf[...] = jnp.maximum(emb, 0.0).reshape(B, Lt, E)

        # ---- stacked LSTM layers with residual connections -------------------
        def lstm_layer(w_ih_ref, w_hh_ref, b_ref):
            # Hoisted, time-independent work: fused bias load + one
            # (B*Lt, E) x (E, 4E) input projection for every timestep at once.
            b_gate = b_ref[...]                                    # (1, 4E)
            w_hh = w_hh_ref[...]                                   # (E, 4E)
            xflat = xbuf[...].reshape(B * Lt, E)
            xproj[...] = (jnp.dot(xflat, w_ih_ref[...],
                                  preferred_element_type=jnp.float32)
                          + b_gate).reshape(B, Lt, E4)

            def step(t, carry):
                h, c = carry
                # Single fused recurrent matmul per timestep: (Lt, E) x (E, 4E).
                gates = xproj[t] + jnp.dot(h, w_hh,
                                           preferred_element_type=jnp.float32)
                # 1 sigmoid + 1 tanh over the full fused gates (2 EUP pushes),
                # sliced afterwards, instead of 4 masked 32-lane pushes.
                sg = jax.nn.sigmoid(gates)
                tg = jnp.tanh(gates)
                i = sg[:, 0 * E:1 * E]
                f = sg[:, 1 * E:2 * E]
                g = tg[:, 2 * E:3 * E]
                o = sg[:, 3 * E:4 * E]
                c = f * c + i * g
                h = o * jnp.tanh(c)
                # Residual add accumulated in place (dropout is identity in
                # eval mode).  xproj was precomputed, so overwriting xbuf[t]
                # here is safe and removes a separate full-array add pass.
                xbuf[t] = xbuf[t] + h
                return h, c

            h0 = jnp.zeros((Lt, E), jnp.float32)
            c0 = jnp.zeros((Lt, E), jnp.float32)
            lax.fori_loop(0, B, step, (h0, c0), unroll=(B <= 8))

        lstm_layer(w_ih0, w_hh0, b0)
        lstm_layer(w_ih1, w_hh1, b1)
        lstm_layer(w_ih2, w_hh2, b2)

        # ---- fused, lane-padded output heads ---------------------------------
        xf = xbuf[...].reshape(B * Lt, E)
        head = jnp.dot(xf, w_head_ref[...],
                       preferred_element_type=jnp.float32) + b_head_ref[...]
        out_ref[...] = head.reshape(B, Lt, Npad)

    return kernel


def lstm_model_forward(x, params, *, K, P):
    """x: (B, L, D) float32 -> (reg (B, L, K, P, 2), cls (B, L, K))."""
    B, L, D = x.shape
    E = params["w_in"].shape[1]
    Npad = params["w_head"].shape[1]
    n_reg = 2 * P * K
    n_out = n_reg + K

    Lt = _pick_l_tile(L)
    grid = (L // Lt,)
    kernel = make_lstm_model_kernel(B, Lt, D, E, Npad)

    def full(shape):  # whole-array block, constant index_map (VMEM resident)
        return pl.BlockSpec(shape, lambda l: (0,) * len(shape))

    layer_specs = []
    for _ in range(3):
        layer_specs += [full((E, 4 * E)), full((E, 4 * E)), full((1, 4 * E))]

    out = pl.pallas_call(
        kernel,
        out_shape=jax.ShapeDtypeStruct((B, L, Npad), jnp.float32),
        grid_spec=pltpu.PrefetchScalarGridSpec(
            num_scalar_prefetch=0,
            grid=grid,
            in_specs=[pl.BlockSpec((B, Lt, D), lambda l: (0, l, 0)),
                      full((D, E)), full((1, E)),
                      *layer_specs,
                      full((E, Npad)), full((1, Npad))],
            out_specs=pl.BlockSpec((B, Lt, Npad), lambda l: (0, l, 0)),
            scratch_shapes=[pltpu.VMEM((B, Lt, E), jnp.float32),        # xbuf
                            pltpu.VMEM((B, Lt, 4 * E), jnp.float32)],   # xproj
        ),
        compiler_params=pltpu.CompilerParams(
            dimension_semantics=("parallel",),
            vmem_limit_bytes=_vmem_limit_bytes(B, Lt, D, E, Npad),
        ),
    )(x, params["w_in"], params["b_in"],
      params["w_ih0"], params["w_hh0"], params["b0"],
      params["w_ih1"], params["w_hh1"], params["b1"],
      params["w_ih2"], params["w_hh2"], params["b2"],
      params["w_head"], params["b_head"])

    reg = out[:, :, :n_reg].reshape(B, L, K, P, 2)
    cls = out[:, :, n_reg:n_out].reshape(B, L, K)
    return reg, cls


def lstm_model_forward_ref(x, params, *, K, P):
    """Pure-JAX reference mirroring the PyTorch forward (eval mode)."""
    B, L, D = x.shape
    E = params["w_in"].shape[1]
    n_reg = 2 * P * K
    n_out = n_reg + K

    emb = x.reshape(B * L, D) @ params["w_in"] + params["b_in"]
    h_x = jnp.maximum(emb, 0.0).reshape(B, L, E)

    for li in range(3):
        w_ih = params[f"w_ih{li}"]   # (E, 4E)
        w_hh = params[f"w_hh{li}"]   # (E, 4E)
        b = params[f"b{li}"]         # (1, 4E), fused b_ih + b_hh
        h = jnp.zeros((L, E), jnp.float32)
        c = jnp.zeros((L, E), jnp.float32)
        outs = []
        for t in range(B):           # time axis = B (PyTorch seq-first quirk)
            x_t = h_x[t]
            gates = x_t @ w_ih + h @ w_hh + b
            i = jax.nn.sigmoid(gates[:, 0 * E:1 * E])
            f = jax.nn.sigmoid(gates[:, 1 * E:2 * E])
            g = jnp.tanh(gates[:, 2 * E:3 * E])
            o = jax.nn.sigmoid(gates[:, 3 * E:4 * E])
            c = f * c + i * g
            h = o * jnp.tanh(c)
            outs.append(x_t + h)
        h_x = jnp.stack(outs, axis=0)

    xf = h_x.reshape(B * L, E)
    head = xf @ params["w_head"] + params["b_head"]
    reg = head[:, :n_reg].reshape(B, L, K, P, 2)
    cls = head[:, n_reg:n_out].reshape(B, L, K)
    return reg, cls


def init_params(key, D, E, K, P):
    """Deterministic synthetic parameters in the fused kernel layout."""
    n_out = 2 * P * K + K
    Npad = _round_up(n_out, 128)

    ks = jax.random.split(key, 24)
    ki = iter(range(24))

    def rnd(shape, scale=0.1):
        return scale * jax.random.normal(ks[next(ki)], shape, jnp.float32)

    params = {
        "w_in": rnd((D, E)),          # nn.Linear(input_dim, E), pre-transposed
        "b_in": rnd((1, E)),
    }
    for li in range(3):
        # Gates (i, f, g, o) fused along the output axis; bias = b_ih + b_hh.
        params[f"w_ih{li}"] = rnd((E, 4 * E))
        params[f"w_hh{li}"] = rnd((E, 4 * E))
        params[f"b{li}"] = rnd((1, 4 * E))
    # Fused heads, lane-padded to a multiple of 128 (padding columns are zero).
    params["w_head"] = jnp.zeros((E, Npad), jnp.float32).at[:, :n_out].set(
        rnd((E, n_out)))
    params["b_head"] = jnp.zeros((1, Npad), jnp.float32).at[:, :n_out].set(
        rnd((1, n_out)))
    # TODO(synk): class_embeddings (nn.Embedding) is unused by forward(); not materialized.
    return params


if __name__ == "__main__":
    # Small shapes consistent with the module's forward.
    B, L, D = 2, 8, 4          # batch, seq-len, input_dim
    E = 32                     # embedding_dim
    K = 3                      # k hypotheses
    P = 6                      # prediction_len

    key = jax.random.PRNGKey(0)
    k_x, k_p = jax.random.split(key)
    x = jax.random.normal(k_x, (B, L, D), jnp.float32)
    params = init_params(k_p, D, E, K, P)

    fwd = jax.jit(functools.partial(lstm_model_forward, K=K, P=P))
    reg, cls = fwd(x, params)
    jax.block_until_ready((reg, cls))

    assert reg.shape == (B, L, K, P, 2), reg.shape
    assert cls.shape == (B, L, K), cls.shape

    reg_ref, cls_ref = lstm_model_forward_ref(x, params, K=K, P=P)
    assert jnp.allclose(reg, reg_ref, rtol=1e-3, atol=1e-3)
    assert jnp.allclose(cls, cls_ref, rtol=1e-3, atol=1e-3)

    print("KERNEL_OK")
</pallas_src>

<mosaic_0001>
module attributes {stable_mosaic.version = 11 : i64} {
  func.func @kernel(%arg0: i32, %arg1: memref<2x8x4xf32, #tpu.memory_space<vmem>>, %arg2: memref<4x32xf32, #tpu.memory_space<vmem>>, %arg3: memref<1x32xf32, #tpu.memory_space<vmem>>, %arg4: memref<32x128xf32, #tpu.memory_space<vmem>>, %arg5: memref<32x128xf32, #tpu.memory_space<vmem>>, %arg6: memref<1x128xf32, #tpu.memory_space<vmem>>, %arg7: memref<32x128xf32, #tpu.memory_space<vmem>>, %arg8: memref<32x128xf32, #tpu.memory_space<vmem>>, %arg9: memref<1x128xf32, #tpu.memory_space<vmem>>, %arg10: memref<32x128xf32, #tpu.memory_space<vmem>>, %arg11: memref<32x128xf32, #tpu.memory_space<vmem>>, %arg12: memref<1x128xf32, #tpu.memory_space<vmem>>, %arg13: memref<32x128xf32, #tpu.memory_space<vmem>>, %arg14: memref<1x128xf32, #tpu.memory_space<vmem>>, %arg15: memref<2x8x128xf32, #tpu.memory_space<vmem>>, %arg16: memref<2x8x32xf32, #tpu.memory_space<vmem>>, %arg17: memref<2x8x128xf32, #tpu.memory_space<vmem>>) attributes {dimension_semantics = [#tpu.dimension_semantics<parallel>], iteration_bounds = array<i64: 1>, scalar_prefetch = 0 : i64, scratch_operands = 2 : i64, tpu.core_type = #tpu.core_type<tc>, window_params = [{transform_indices = @transform_0, window_bounds = array<i64: 2, 8, 4>}, {pipeline_mode = #tpu.pipeline_mode<synchronous>, transform_indices = @transform_1, window_bounds = array<i64: 4, 32>}, {pipeline_mode = #tpu.pipeline_mode<synchronous>, transform_indices = @transform_2, window_bounds = array<i64: 1, 32>}, {pipeline_mode = #tpu.pipeline_mode<synchronous>, transform_indices = @transform_3, window_bounds = array<i64: 32, 128>}, {pipeline_mode = #tpu.pipeline_mode<synchronous>, transform_indices = @transform_4, window_bounds = array<i64: 32, 128>}, {pipeline_mode = #tpu.pipeline_mode<synchronous>, transform_indices = @transform_5, window_bounds = array<i64: 1, 128>}, {pipeline_mode = #tpu.pipeline_mode<synchronous>, transform_indices = @transform_6, window_bounds = array<i64: 32, 128>}, {pipeline_mode = #tpu.pipeline_mode<synchronous>, transform_indices = @transform_7, window_bounds = array<i64: 32, 128>}, {pipeline_mode = #tpu.pipeline_mode<synchronous>, transform_indices = @transform_8, window_bounds = array<i64: 1, 128>}, {pipeline_mode = #tpu.pipeline_mode<synchronous>, transform_indices = @transform_9, window_bounds = array<i64: 32, 128>}, {pipeline_mode = #tpu.pipeline_mode<synchronous>, transform_indices = @transform_10, window_bounds = array<i64: 32, 128>}, {pipeline_mode = #tpu.pipeline_mode<synchronous>, transform_indices = @transform_11, window_bounds = array<i64: 1, 128>}, {pipeline_mode = #tpu.pipeline_mode<synchronous>, transform_indices = @transform_12, window_bounds = array<i64: 32, 128>}, {pipeline_mode = #tpu.pipeline_mode<synchronous>, transform_indices = @transform_13, window_bounds = array<i64: 1, 128>}, {transform_indices = @transform_14, window_bounds = array<i64: 2, 8, 128>}]} {
    %c0 = arith.constant 0 : index
    %c0_0 = arith.constant 0 : index
    %c0_1 = arith.constant 0 : index
    %0 = vector.load %arg1[%c0, %c0_0, %c0_1] : memref<2x8x4xf32, #tpu.memory_space<vmem>>, vector<2x8x4xf32>
    %1 = vector.shape_cast %0 : vector<2x8x4xf32> to vector<16x4xf32>
    %c0_2 = arith.constant 0 : index
    %c0_3 = arith.constant 0 : index
    %2 = vector.load %arg2[%c0_2, %c0_3] : memref<4x32xf32, #tpu.memory_space<vmem>>, vector<4x32xf32>
    %cst = arith.constant dense<0.000000e+00> : vector<16x32xf32>
    %3 = tpu.matmul %1, %2, %cst {dimension_numbers = #tpu.dot_dimension_numbers<[1], [0], [0], [1], [0, 0, 1, 1], [], []>} : vector<16x4xf32>, vector<4x32xf32>, vector<16x32xf32> -> vector<16x32xf32>
    %c0_4 = arith.constant 0 : index
    %c0_5 = arith.constant 0 : index
    %4 = vector.load %arg3[%c0_4, %c0_5] : memref<1x32xf32, #tpu.memory_space<vmem>>, vector<1x32xf32>
    %5 = vector.broadcast %4 : vector<1x32xf32> to vector<16x32xf32>
    %6 = arith.addf %3, %5 : vector<16x32xf32>
    %cst_6 = arith.constant 0.000000e+00 : f32
    %7 = vector.broadcast %cst_6 : f32 to vector<16x32xf32>
    %8 = arith.maximumf %6, %7 : vector<16x32xf32>
    %9 = vector.shape_cast %8 : vector<16x32xf32> to vector<2x8x32xf32>
    %c0_7 = arith.constant 0 : index
    %c0_8 = arith.constant 0 : index
    %c0_9 = arith.constant 0 : index
    %10 = vector.load %arg16[%c0_7, %c0_8, %c0_9] : memref<2x8x32xf32, #tpu.memory_space<vmem>>, vector<2x8x32xf32>
    tpu.vector_store %arg16[%c0_7, %c0_8, %c0_9], %9 {strides = array<i32>} : memref<2x8x32xf32, #tpu.memory_space<vmem>>, vector<2x8x32xf32>,
    %c0_10 = arith.constant 0 : index
    %c0_11 = arith.constant 0 : index
    %11 = vector.load %arg6[%c0_10, %c0_11] : memref<1x128xf32, #tpu.memory_space<vmem>>, vector<1x128xf32>
    %c0_12 = arith.constant 0 : index
    %c0_13 = arith.constant 0 : index
    %12 = vector.load %arg5[%c0_12, %c0_13] : memref<32x128xf32, #tpu.memory_space<vmem>>, vector<32x128xf32>
    %c0_14 = arith.constant 0 : index
    %c0_15 = arith.constant 0 : index
    %c0_16 = arith.constant 0 : index
    %13 = vector.load %arg16[%c0_14, %c0_15, %c0_16] : memref<2x8x32xf32, #tpu.memory_space<vmem>>, vector<2x8x32xf32>
    %14 = vector.shape_cast %13 : vector<2x8x32xf32> to vector<16x32xf32>
    %c0_17 = arith.constant 0 : index
    %c0_18 = arith.constant 0 : index
    %15 = vector.load %arg4[%c0_17, %c0_18] : memref<32x128xf32, #tpu.memory_space<vmem>>, vector<32x128xf32>
    %cst_19 = arith.constant dense<0.000000e+00> : vector<16x128xf32>
    %16 = tpu.matmul %14, %15, %cst_19 {dimension_numbers = #tpu.dot_dimension_numbers<[1], [0], [0], [1], [0, 0, 1, 1], [], []>} : vector<16x32xf32>, vector<32x128xf32>, vector<16x128xf32> -> vector<16x128xf32>
    %17 = vector.broadcast %11 : vector<1x128xf32> to vector<16x128xf32>
    %18 = arith.addf %16, %17 : vector<16x128xf32>
    %19 = vector.shape_cast %18 : vector<16x128xf32> to vector<2x8x128xf32>
    %c0_20 = arith.constant 0 : index
    %c0_21 = arith.constant 0 : index
    %c0_22 = arith.constant 0 : index
    %20 = vector.load %arg17[%c0_20, %c0_21, %c0_22] : memref<2x8x128xf32, #tpu.memory_space<vmem>>, vector<2x8x128xf32>
    tpu.vector_store %arg17[%c0_20, %c0_21, %c0_22], %19 {strides = array<i32>} : memref<2x8x128xf32, #tpu.memory_space<vmem>>, vector<2x8x128xf32>,
    %cst_23 = arith.constant 0.000000e+00 : f32
    %21 = vector.broadcast %cst_23 : f32 to vector<8x32xf32>
    %cst_24 = arith.constant 0.000000e+00 : f32
    %22 = vector.broadcast %cst_24 : f32 to vector<8x32xf32>
    %c0_i32 = arith.constant 0 : i32
    %23 = arith.index_cast %c0_i32 : i32 to index
    %c0_25 = arith.constant 0 : index
    %c0_26 = arith.constant 0 : index
    %24 = vector.load %arg17[%23, %c0_25, %c0_26] : memref<2x8x128xf32, #tpu.memory_space<vmem>>, vector<1x8x128xf32>
    %25 = vector.shape_cast %24 : vector<1x8x128xf32> to vector<8x128xf32>
    %cst_27 = arith.constant dense<0.000000e+00> : vector<8x128xf32>
    %26 = tpu.matmul %21, %12, %cst_27 {dimension_numbers = #tpu.dot_dimension_numbers<[1], [0], [0], [1], [0, 0, 1, 1], [], []>} : vector<8x32xf32>, vector<32x128xf32>, vector<8x128xf32> -> vector<8x128xf32>
    %27 = arith.addf %25, %26 : vector<8x128xf32>
    %28 = arith.negf %27 : vector<8x128xf32>
    %29 = math.exp %28 : vector<8x128xf32>
    %cst_28 = arith.constant 1.000000e+00 : f32
    %30 = vector.broadcast %cst_28 : f32 to vector<8x128xf32>
    %31 = arith.addf %30, %29 : vector<8x128xf32>
    %32 = arith.divf %30, %31 : vector<8x128xf32>
    %33 = math.tanh %27 : vector<8x128xf32>
    %34 = vector.extract_strided_slice %32 {offsets = [0, 0], sizes = [8, 32], strides = [1, 1]} : vector<8x128xf32> to vector<8x32xf32>
    %35 = vector.extract_strided_slice %32 {offsets = [0, 32], sizes = [8, 32], strides = [1, 1]} : vector<8x128xf32> to vector<8x32xf32>
    %36 = vector.extract_strided_slice %33 {offsets = [0, 64], sizes = [8, 32], strides = [1, 1]} : vector<8x128xf32> to vector<8x32xf32>
    %37 = vector.extract_strided_slice %32 {offsets = [0, 96], sizes = [8, 32], strides = [1, 1]} : vector<8x128xf32> to vector<8x32xf32>
    %38 = arith.mulf %35, %22 : vector<8x32xf32>
    %39 = arith.mulf %34, %36 : vector<8x32xf32>
    %40 = arith.addf %38, %39 : vector<8x32xf32>
    %41 = math.tanh %40 : vector<8x32xf32>
    %42 = arith.mulf %37, %41 : vector<8x32xf32>
    %43 = arith.index_cast %c0_i32 : i32 to index
    %c0_29 = arith.constant 0 : index
    %c0_30 = arith.constant 0 : index
    %44 = vector.load %arg16[%43, %c0_29, %c0_30] : memref<2x8x32xf32, #tpu.memory_space<vmem>>, vector<1x8x32xf32>
    %45 = vector.shape_cast %44 : vector<1x8x32xf32> to vector<8x32xf32>
    %46 = arith.addf %45, %42 : vector<8x32xf32>
    %47 = arith.index_cast %c0_i32 : i32 to index
    %c0_31 = arith.constant 0 : index
    %c0_32 = arith.constant 0 : index
    %48 = vector.load %arg16[%47, %c0_31, %c0_32] : memref<2x8x32xf32, #tpu.memory_space<vmem>>, vector<1x8x32xf32>
    %49 = vector.shape_cast %48 : vector<1x8x32xf32> to vector<8x32xf32>
    %50 = vector.shape_cast %46 : vector<8x32xf32> to vector<1x8x32xf32>
    tpu.vector_store %arg16[%47, %c0_31, %c0_32], %50 {strides = array<i32>} : memref<2x8x32xf32, #tpu.memory_space<vmem>>, vector<1x8x32xf32>,
    %c1_i32 = arith.constant 1 : i32
    %51 = arith.index_cast %c1_i32 : i32 to index
    %c0_33 = arith.constant 0 : index
    %c0_34 = arith.constant 0 : index
    %52 = vector.load %arg17[%51, %c0_33, %c0_34] : memref<2x8x128xf32, #tpu.memory_space<vmem>>, vector<1x8x128xf32>
    %53 = vector.shape_cast %52 : vector<1x8x128xf32> to vector<8x128xf32>
    %cst_35 = arith.constant dense<0.000000e+00> : vector<8x128xf32>
    %54 = tpu.matmul %42, %12, %cst_35 {dimension_numbers = #tpu.dot_dimension_numbers<[1], [0], [0], [1], [0, 0, 1, 1], [], []>} : vector<8x32xf32>, vector<32x128xf32>, vector<8x128xf32> -> vector<8x128xf32>
    %55 = arith.addf %53, %54 : vector<8x128xf32>
    %56 = arith.negf %55 : vector<8x128xf32>
    %57 = math.exp %56 : vector<8x128xf32>
    %cst_36 = arith.constant 1.000000e+00 : f32
    %58 = vector.broadcast %cst_36 : f32 to vector<8x128xf32>
    %59 = arith.addf %58, %57 : vector<8x128xf32>
    %60 = arith.divf %58, %59 : vector<8x128xf32>
    %61 = math.tanh %55 : vector<8x128xf32>
    %62 = vector.extract_strided_slice %60 {offsets = [0, 0], sizes = [8, 32], strides = [1, 1]} : vector<8x128xf32> to vector<8x32xf32>
    %63 = vector.extract_strided_slice %60 {offsets = [0, 32], sizes = [8, 32], strides = [1, 1]} : vector<8x128xf32> to vector<8x32xf32>
    %64 = vector.extract_strided_slice %61 {offsets = [0, 64], sizes = [8, 32], strides = [1, 1]} : vector<8x128xf32> to vector<8x32xf32>
    %65 = vector.extract_strided_slice %60 {offsets = [0, 96], sizes = [8, 32], strides = [1, 1]} : vector<8x128xf32> to vector<8x32xf32>
    %66 = arith.mulf %63, %40 : vector<8x32xf32>
    %67 = arith.mulf %62, %64 : vector<8x32xf32>
    %68 = arith.addf %66, %67 : vector<8x32xf32>
    %69 = math.tanh %68 : vector<8x32xf32>
    %70 = arith.mulf %65, %69 : vector<8x32xf32>
    %71 = arith.index_cast %c1_i32 : i32 to index
    %c0_37 = arith.constant 0 : index
    %c0_38 = arith.constant 0 : index
    %72 = vector.load %arg16[%71, %c0_37, %c0_38] : memref<2x8x32xf32, #tpu.memory_space<vmem>>, vector<1x8x32xf32>
    %73 = vector.shape_cast %72 : vector<1x8x32xf32> to vector<8x32xf32>
    %74 = arith.addf %73, %70 : vector<8x32xf32>
    %75 = arith.index_cast %c1_i32 : i32 to index
    %c0_39 = arith.constant 0 : index
    %c0_40 = arith.constant 0 : index
    %76 = vector.load %arg16[%75, %c0_39, %c0_40] : memref<2x8x32xf32, #tpu.memory_space<vmem>>, vector<1x8x32xf32>
    %77 = vector.shape_cast %76 : vector<1x8x32xf32> to vector<8x32xf32>
    %78 = vector.shape_cast %74 : vector<8x32xf32> to vector<1x8x32xf32>
    tpu.vector_store %arg16[%75, %c0_39, %c0_40], %78 {strides = array<i32>} : memref<2x8x32xf32, #tpu.memory_space<vmem>>, vector<1x8x32xf32>,
    %c2_i32 = arith.constant 2 : i32
    %c0_41 = arith.constant 0 : index
    %c0_42 = arith.constant 0 : index
    %79 = vector.load %arg9[%c0_41, %c0_42] : memref<1x128xf32, #tpu.memory_space<vmem>>, vector<1x128xf32>
    %c0_43 = arith.constant 0 : index
    %c0_44 = arith.constant 0 : index
    %80 = vector.load %arg8[%c0_43, %c0_44] : memref<32x128xf32, #tpu.memory_space<vmem>>, vector<32x128xf32>
    %c0_45 = arith.constant 0 : index
    %c0_46 = arith.constant 0 : index
    %c0_47 = arith.constant 0 : index
    %81 = vector.load %arg16[%c0_45, %c0_46, %c0_47] : memref<2x8x32xf32, #tpu.memory_space<vmem>>, vector<2x8x32xf32>
    %82 = vector.shape_cast %81 : vector<2x8x32xf32> to vector<16x32xf32>
    %c0_48 = arith.constant 0 : index
    %c0_49 = arith.constant 0 : index
    %83 = vector.load %arg7[%c0_48, %c0_49] : memref<32x128xf32, #tpu.memory_space<vmem>>, vector<32x128xf32>
    %cst_50 = arith.constant dense<0.000000e+00> : vector<16x128xf32>
    %84 = tpu.matmul %82, %83, %cst_50 {dimension_numbers = #tpu.dot_dimension_numbers<[1], [0], [0], [1], [0, 0, 1, 1], [], []>} : vector<16x32xf32>, vector<32x128xf32>, vector<16x128xf32> -> vector<16x128xf32>
    %85 = vector.broadcast %79 : vector<1x128xf32> to vector<16x128xf32>
    %86 = arith.addf %84, %85 : vector<16x128xf32>
    %87 = vector.shape_cast %86 : vector<16x128xf32> to vector<2x8x128xf32>
    %c0_51 = arith.constant 0 : index
    %c0_52 = arith.constant 0 : index
    %c0_53 = arith.constant 0 : index
    %88 = vector.load %arg17[%c0_51, %c0_52, %c0_53] : memref<2x8x128xf32, #tpu.memory_space<vmem>>, vector<2x8x128xf32>
    tpu.vector_store %arg17[%c0_51, %c0_52, %c0_53], %87 {strides = array<i32>} : memref<2x8x128xf32, #tpu.memory_space<vmem>>, vector<2x8x128xf32>,
    %cst_54 = arith.constant 0.000000e+00 : f32
    %89 = vector.broadcast %cst_54 : f32 to vector<8x32xf32>
    %cst_55 = arith.constant 0.000000e+00 : f32
    %90 = vector.broadcast %cst_55 : f32 to vector<8x32xf32>
    %c0_i32_56 = arith.constant 0 : i32
    %91 = arith.index_cast %c0_i32_56 : i32 to index
    %c0_57 = arith.constant 0 : index
    %c0_58 = arith.constant 0 : index
    %92 = vector.load %arg17[%91, %c0_57, %c0_58] : memref<2x8x128xf32, #tpu.memory_space<vmem>>, vector<1x8x128xf32>
    %93 = vector.shape_cast %92 : vector<1x8x128xf32> to vector<8x128xf32>
    %cst_59 = arith.constant dense<0.000000e+00> : vector<8x128xf32>
    %94 = tpu.matmul %89, %80, %cst_59 {dimension_numbers = #tpu.dot_dimension_numbers<[1], [0], [0], [1], [0, 0, 1, 1], [], []>} : vector<8x32xf32>, vector<32x128xf32>, vector<8x128xf32> -> vector<8x128xf32>
    %95 = arith.addf %93, %94 : vector<8x128xf32>
    %96 = arith.negf %95 : vector<8x128xf32>
    %97 = math.exp %96 : vector<8x128xf32>
    %cst_60 = arith.constant 1.000000e+00 : f32
    %98 = vector.broadcast %cst_60 : f32 to vector<8x128xf32>
    %99 = arith.addf %98, %97 : vector<8x128xf32>
    %100 = arith.divf %98, %99 : vector<8x128xf32>
    %101 = math.tanh %95 : vector<8x128xf32>
    %102 = vector.extract_strided_slice %100 {offsets = [0, 0], sizes = [8, 32], strides = [1, 1]} : vector<8x128xf32> to vector<8x32xf32>
    %103 = vector.extract_strided_slice %100 {offsets = [0, 32], sizes = [8, 32], strides = [1, 1]} : vector<8x128xf32> to vector<8x32xf32>
    %104 = vector.extract_strided_slice %101 {offsets = [0, 64], sizes = [8, 32], strides = [1, 1]} : vector<8x128xf32> to vector<8x32xf32>
    %105 = vector.extract_strided_slice %100 {offsets = [0, 96], sizes = [8, 32], strides = [1, 1]} : vector<8x128xf32> to vector<8x32xf32>
    %106 = arith.mulf %103, %90 : vector<8x32xf32>
    %107 = arith.mulf %102, %104 : vector<8x32xf32>
    %108 = arith.addf %106, %107 : vector<8x32xf32>
    %109 = math.tanh %108 : vector<8x32xf32>
    %110 = arith.mulf %105, %109 : vector<8x32xf32>
    %111 = arith.index_cast %c0_i32_56 : i32 to index
    %c0_61 = arith.constant 0 : index
    %c0_62 = arith.constant 0 : index
    %112 = vector.load %arg16[%111, %c0_61, %c0_62] : memref<2x8x32xf32, #tpu.memory_space<vmem>>, vector<1x8x32xf32>
    %113 = vector.shape_cast %112 : vector<1x8x32xf32> to vector<8x32xf32>
    %114 = arith.addf %113, %110 : vector<8x32xf32>
    %115 = arith.index_cast %c0_i32_56 : i32 to index
    %c0_63 = arith.constant 0 : index
    %c0_64 = arith.constant 0 : index
    %116 = vector.load %arg16[%115, %c0_63, %c0_64] : memref<2x8x32xf32, #tpu.memory_space<vmem>>, vector<1x8x32xf32>
    %117 = vector.shape_cast %116 : vector<1x8x32xf32> to vector<8x32xf32>
    %118 = vector.shape_cast %114 : vector<8x32xf32> to vector<1x8x32xf32>
    tpu.vector_store %arg16[%115, %c0_63, %c0_64], %118 {strides = array<i32>} : memref<2x8x32xf32, #tpu.memory_space<vmem>>, vector<1x8x32xf32>,
    %c1_i32_65 = arith.constant 1 : i32
    %119 = arith.index_cast %c1_i32_65 : i32 to index
    %c0_66 = arith.constant 0 : index
    %c0_67 = arith.constant 0 : index
    %120 = vector.load %arg17[%119, %c0_66, %c0_67] : memref<2x8x128xf32, #tpu.memory_space<vmem>>, vector<1x8x128xf32>
    %121 = vector.shape_cast %120 : vector<1x8x128xf32> to vector<8x128xf32>
    %cst_68 = arith.constant dense<0.000000e+00> : vector<8x128xf32>
    %122 = tpu.matmul %110, %80, %cst_68 {dimension_numbers = #tpu.dot_dimension_numbers<[1], [0], [0], [1], [0, 0, 1, 1], [], []>} : vector<8x32xf32>, vector<32x128xf32>, vector<8x128xf32> -> vector<8x128xf32>
    %123 = arith.addf %121, %122 : vector<8x128xf32>
    %124 = arith.negf %123 : vector<8x128xf32>
    %125 = math.exp %124 : vector<8x128xf32>
    %cst_69 = arith.constant 1.000000e+00 : f32
    %126 = vector.broadcast %cst_69 : f32 to vector<8x128xf32>
    %127 = arith.addf %126, %125 : vector<8x128xf32>
    %128 = arith.divf %126, %127 : vector<8x128xf32>
    %129 = math.tanh %123 : vector<8x128xf32>
    %130 = vector.extract_strided_slice %128 {offsets = [0, 0], sizes = [8, 32], strides = [1, 1]} : vector<8x128xf32> to vector<8x32xf32>
    %131 = vector.extract_strided_slice %128 {offsets = [0, 32], sizes = [8, 32], strides = [1, 1]} : vector<8x128xf32> to vector<8x32xf32>
    %132 = vector.extract_strided_slice %129 {offsets = [0, 64], sizes = [8, 32], strides = [1, 1]} : vector<8x128xf32> to vector<8x32xf32>
    %133 = vector.extract_strided_slice %128 {offsets = [0, 96], sizes = [8, 32], strides = [1, 1]} : vector<8x128xf32> to vector<8x32xf32>
    %134 = arith.mulf %131, %108 : vector<8x32xf32>
    %135 = arith.mulf %130, %132 : vector<8x32xf32>
    %136 = arith.addf %134, %135 : vector<8x32xf32>
    %137 = math.tanh %136 : vector<8x32xf32>
    %138 = arith.mulf %133, %137 : vector<8x32xf32>
    %139 = arith.index_cast %c1_i32_65 : i32 to index
    %c0_70 = arith.constant 0 : index
    %c0_71 = arith.constant 0 : index
    %140 = vector.load %arg16[%139, %c0_70, %c0_71] : memref<2x8x32xf32, #tpu.memory_space<vmem>>, vector<1x8x32xf32>
    %141 = vector.shape_cast %140 : vector<1x8x32xf32> to vector<8x32xf32>
    %142 = arith.addf %141, %138 : vector<8x32xf32>
    %143 = arith.index_cast %c1_i32_65 : i32 to index
    %c0_72 = arith.constant 0 : index
    %c0_73 = arith.constant 0 : index
    %144 = vector.load %arg16[%143, %c0_72, %c0_73] : memref<2x8x32xf32, #tpu.memory_space<vmem>>, vector<1x8x32xf32>
    %145 = vector.shape_cast %144 : vector<1x8x32xf32> to vector<8x32xf32>
    %146 = vector.shape_cast %142 : vector<8x32xf32> to vector<1x8x32xf32>
    tpu.vector_store %arg16[%143, %c0_72, %c0_73], %146 {strides = array<i32>} : memref<2x8x32xf32, #tpu.memory_space<vmem>>, vector<1x8x32xf32>,
    %c2_i32_74 = arith.constant 2 : i32
    %c0_75 = arith.constant 0 : index
    %c0_76 = arith.constant 0 : index
    %147 = vector.load %arg12[%c0_75, %c0_76] : memref<1x128xf32, #tpu.memory_space<vmem>>, vector<1x128xf32>
    %c0_77 = arith.constant 0 : index
    %c0_78 = arith.constant 0 : index
    %148 = vector.load %arg11[%c0_77, %c0_78] : memref<32x128xf32, #tpu.memory_space<vmem>>, vector<32x128xf32>
    %c0_79 = arith.constant 0 : index
    %c0_80 = arith.constant 0 : index
    %c0_81 = arith.constant 0 : index
    %149 = vector.load %arg16[%c0_79, %c0_80, %c0_81] : memref<2x8x32xf32, #tpu.memory_space<vmem>>, vector<2x8x32xf32>
    %150 = vector.shape_cast %149 : vector<2x8x32xf32> to vector<16x32xf32>
    %c0_82 = arith.constant 0 : index
    %c0_83 = arith.constant 0 : index
    %151 = vector.load %arg10[%c0_82, %c0_83] : memref<32x128xf32, #tpu.memory_space<vmem>>, vector<32x128xf32>
    %cst_84 = arith.constant dense<0.000000e+00> : vector<16x128xf32>
    %152 = tpu.matmul %150, %151, %cst_84 {dimension_numbers = #tpu.dot_dimension_numbers<[1], [0], [0], [1], [0, 0, 1, 1], [], []>} : vector<16x32xf32>, vector<32x128xf32>, vector<16x128xf32> -> vector<16x128xf32>
    %153 = vector.broadcast %147 : vector<1x128xf32> to vector<16x128xf32>
    %154 = arith.addf %152, %153 : vector<16x128xf32>
    %155 = vector.shape_cast %154 : vector<16x128xf32> to vector<2x8x128xf32>
    %c0_85 = arith.constant 0 : index
    %c0_86 = arith.constant 0 : index
    %c0_87 = arith.constant 0 : index
    %156 = vector.load %arg17[%c0_85, %c0_86, %c0_87] : memref<2x8x128xf32, #tpu.memory_space<vmem>>, vector<2x8x128xf32>
    tpu.vector_store %arg17[%c0_85, %c0_86, %c0_87], %155 {strides = array<i32>} : memref<2x8x128xf32, #tpu.memory_space<vmem>>, vector<2x8x128xf32>,
    %cst_88 = arith.constant 0.000000e+00 : f32
    %157 = vector.broadcast %cst_88 : f32 to vector<8x32xf32>
    %cst_89 = arith.constant 0.000000e+00 : f32
    %158 = vector.broadcast %cst_89 : f32 to vector<8x32xf32>
    %c0_i32_90 = arith.constant 0 : i32
    %159 = arith.index_cast %c0_i32_90 : i32 to index
    %c0_91 = arith.constant 0 : index
    %c0_92 = arith.constant 0 : index
    %160 = vector.load %arg17[%159, %c0_91, %c0_92] : memref<2x8x128xf32, #tpu.memory_space<vmem>>, vector<1x8x128xf32>
    %161 = vector.shape_cast %160 : vector<1x8x128xf32> to vector<8x128xf32>
    %cst_93 = arith.constant dense<0.000000e+00> : vector<8x128xf32>
    %162 = tpu.matmul %157, %148, %cst_93 {dimension_numbers = #tpu.dot_dimension_numbers<[1], [0], [0], [1], [0, 0, 1, 1], [], []>} : vector<8x32xf32>, vector<32x128xf32>, vector<8x128xf32> -> vector<8x128xf32>
    %163 = arith.addf %161, %162 : vector<8x128xf32>
    %164 = arith.negf %163 : vector<8x128xf32>
    %165 = math.exp %164 : vector<8x128xf32>
    %cst_94 = arith.constant 1.000000e+00 : f32
    %166 = vector.broadcast %cst_94 : f32 to vector<8x128xf32>
    %167 = arith.addf %166, %165 : vector<8x128xf32>
    %168 = arith.divf %166, %167 : vector<8x128xf32>
    %169 = math.tanh %163 : vector<8x128xf32>
    %170 = vector.extract_strided_slice %168 {offsets = [0, 0], sizes = [8, 32], strides = [1, 1]} : vector<8x128xf32> to vector<8x32xf32>
    %171 = vector.extract_strided_slice %168 {offsets = [0, 32], sizes = [8, 32], strides = [1, 1]} : vector<8x128xf32> to vector<8x32xf32>
    %172 = vector.extract_strided_slice %169 {offsets = [0, 64], sizes = [8, 32], strides = [1, 1]} : vector<8x128xf32> to vector<8x32xf32>
    %173 = vector.extract_strided_slice %168 {offsets = [0, 96], sizes = [8, 32], strides = [1, 1]} : vector<8x128xf32> to vector<8x32xf32>
    %174 = arith.mulf %171, %158 : vector<8x32xf32>
    %175 = arith.mulf %170, %172 : vector<8x32xf32>
    %176 = arith.addf %174, %175 : vector<8x32xf32>
    %177 = math.tanh %176 : vector<8x32xf32>
    %178 = arith.mulf %173, %177 : vector<8x32xf32>
    %179 = arith.index_cast %c0_i32_90 : i32 to index
    %c0_95 = arith.constant 0 : index
    %c0_96 = arith.constant 0 : index
    %180 = vector.load %arg16[%179, %c0_95, %c0_96] : memref<2x8x32xf32, #tpu.memory_space<vmem>>, vector<1x8x32xf32>
    %181 = vector.shape_cast %180 : vector<1x8x32xf32> to vector<8x32xf32>
    %182 = arith.addf %181, %178 : vector<8x32xf32>
    %183 = arith.index_cast %c0_i32_90 : i32 to index
    %c0_97 = arith.constant 0 : index
    %c0_98 = arith.constant 0 : index
    %184 = vector.load %arg16[%183, %c0_97, %c0_98] : memref<2x8x32xf32, #tpu.memory_space<vmem>>, vector<1x8x32xf32>
    %185 = vector.shape_cast %184 : vector<1x8x32xf32> to vector<8x32xf32>
    %186 = vector.shape_cast %182 : vector<8x32xf32> to vector<1x8x32xf32>
    tpu.vector_store %arg16[%183, %c0_97, %c0_98], %186 {strides = array<i32>} : memref<2x8x32xf32, #tpu.memory_space<vmem>>, vector<1x8x32xf32>,
    %c1_i32_99 = arith.constant 1 : i32
    %187 = arith.index_cast %c1_i32_99 : i32 to index
    %c0_100 = arith.constant 0 : index
    %c0_101 = arith.constant 0 : index
    %188 = vector.load %arg17[%187, %c0_100, %c0_101] : memref<2x8x128xf32, #tpu.memory_space<vmem>>, vector<1x8x128xf32>
    %189 = vector.shape_cast %188 : vector<1x8x128xf32> to vector<8x128xf32>
    %cst_102 = arith.constant dense<0.000000e+00> : vector<8x128xf32>
    %190 = tpu.matmul %178, %148, %cst_102 {dimension_numbers = #tpu.dot_dimension_numbers<[1], [0], [0], [1], [0, 0, 1, 1], [], []>} : vector<8x32xf32>, vector<32x128xf32>, vector<8x128xf32> -> vector<8x128xf32>
    %191 = arith.addf %189, %190 : vector<8x128xf32>
    %192 = arith.negf %191 : vector<8x128xf32>
    %193 = math.exp %192 : vector<8x128xf32>
    %cst_103 = arith.constant 1.000000e+00 : f32
    %194 = vector.broadcast %cst_103 : f32 to vector<8x128xf32>
    %195 = arith.addf %194, %193 : vector<8x128xf32>
    %196 = arith.divf %194, %195 : vector<8x128xf32>
    %197 = math.tanh %191 : vector<8x128xf32>
    %198 = vector.extract_strided_slice %196 {offsets = [0, 0], sizes = [8, 32], strides = [1, 1]} : vector<8x128xf32> to vector<8x32xf32>
    %199 = vector.extract_strided_slice %196 {offsets = [0, 32], sizes = [8, 32], strides = [1, 1]} : vector<8x128xf32> to vector<8x32xf32>
    %200 = vector.extract_strided_slice %197 {offsets = [0, 64], sizes = [8, 32], strides = [1, 1]} : vector<8x128xf32> to vector<8x32xf32>
    %201 = vector.extract_strided_slice %196 {offsets = [0, 96], sizes = [8, 32], strides = [1, 1]} : vector<8x128xf32> to vector<8x32xf32>
    %202 = arith.mulf %199, %176 : vector<8x32xf32>
    %203 = arith.mulf %198, %200 : vector<8x32xf32>
    %204 = arith.addf %202, %203 : vector<8x32xf32>
    %205 = math.tanh %204 : vector<8x32xf32>
    %206 = arith.mulf %201, %205 : vector<8x32xf32>
    %207 = arith.index_cast %c1_i32_99 : i32 to index
    %c0_104 = arith.constant 0 : index
    %c0_105 = arith.constant 0 : index
    %208 = vector.load %arg16[%207, %c0_104, %c0_105] : memref<2x8x32xf32, #tpu.memory_space<vmem>>, vector<1x8x32xf32>
    %209 = vector.shape_cast %208 : vector<1x8x32xf32> to vector<8x32xf32>
    %210 = arith.addf %209, %206 : vector<8x32xf32>
    %211 = arith.index_cast %c1_i32_99 : i32 to index
    %c0_106 = arith.constant 0 : index
    %c0_107 = arith.constant 0 : index
    %212 = vector.load %arg16[%211, %c0_106, %c0_107] : memref<2x8x32xf32, #tpu.memory_space<vmem>>, vector<1x8x32xf32>
    %213 = vector.shape_cast %212 : vector<1x8x32xf32> to vector<8x32xf32>
    %214 = vector.shape_cast %210 : vector<8x32xf32> to vector<1x8x32xf32>
    tpu.vector_store %arg16[%211, %c0_106, %c0_107], %214 {strides = array<i32>} : memref<2x8x32xf32, #tpu.memory_space<vmem>>, vector<1x8x32xf32>,
    %c2_i32_108 = arith.constant 2 : i32
    %c0_109 = arith.constant 0 : index
    %c0_110 = arith.constant 0 : index
    %c0_111 = arith.constant 0 : index
    %215 = vector.load %arg16[%c0_109, %c0_110, %c0_111] : memref<2x8x32xf32, #tpu.memory_space<vmem>>, vector<2x8x32xf32>
    %216 = vector.shape_cast %215 : vector<2x8x32xf32> to vector<16x32xf32>
    %c0_112 = arith.constant 0 : index
    %c0_113 = arith.constant 0 : index
    %217 = vector.load %arg13[%c0_112, %c0_113] : memref<32x128xf32, #tpu.memory_space<vmem>>, vector<32x128xf32>
    %cst_114 = arith.constant dense<0.000000e+00> : vector<16x128xf32>
    %218 = tpu.matmul %216, %217, %cst_114 {dimension_numbers = #tpu.dot_dimension_numbers<[1], [0], [0], [1], [0, 0, 1, 1], [], []>} : vector<16x32xf32>, vector<32x128xf32>, vector<16x128xf32> -> vector<16x128xf32>
    %c0_115 = arith.constant 0 : index
    %c0_116 = arith.constant 0 : index
    %219 = vector.load %arg14[%c0_115, %c0_116] : memref<1x128xf32, #tpu.memory_space<vmem>>, vector<1x128xf32>
    %220 = vector.broadcast %219 : vector<1x128xf32> to vector<16x128xf32>
    %221 = arith.addf %218, %220 : vector<16x128xf32>
    %222 = vector.shape_cast %221 : vector<16x128xf32> to vector<2x8x128xf32>
    %c0_117 = arith.constant 0 : index
    %c0_118 = arith.constant 0 : index
    %c0_119 = arith.constant 0 : index
    %223 = vector.load %arg15[%c0_117, %c0_118, %c0_119] : memref<2x8x128xf32, #tpu.memory_space<vmem>>, vector<2x8x128xf32>
    tpu.vector_store %arg15[%c0_117, %c0_118, %c0_119], %222 {strides = array<i32>} : memref<2x8x128xf32, #tpu.memory_space<vmem>>, vector<2x8x128xf32>,
    return
  }
  func.func @transform_0(%arg0: i32) -> (i32, i32, i32) {
    %c0_i32 = arith.constant 0 : i32
    %c0_i32_0 = arith.constant 0 : i32
    %c0_i32_1 = arith.constant 0 : i32
    return %c0_i32, %arg0, %c0_i32_0 : i32, i32, i32
  }
  func.func @transform_1(%arg0: i32) -> (i32, i32) {
    %c0_i32 = arith.constant 0 : i32
    %c0_i32_0 = arith.constant 0 : i32
    %c0_i32_1 = arith.constant 0 : i32
    return %c0_i32, %c0_i32_0 : i32, i32
  }
  func.func @transform_2(%arg0: i32) -> (i32, i32) {
    %c0_i32 = arith.constant 0 : i32
    %c0_i32_0 = arith.constant 0 : i32
    %c0_i32_1 = arith.constant 0 : i32
    return %c0_i32, %c0_i32_0 : i32, i32
  }
  func.func @transform_3(%arg0: i32) -> (i32, i32) {
    %c0_i32 = arith.constant 0 : i32
    %c0_i32_0 = arith.constant 0 : i32
    %c0_i32_1 = arith.constant 0 : i32
    return %c0_i32, %c0_i32_0 : i32, i32
  }
  func.func @transform_4(%arg0: i32) -> (i32, i32) {
    %c0_i32 = arith.constant 0 : i32
    %c0_i32_0 = arith.constant 0 : i32
    %c0_i32_1 = arith.constant 0 : i32
    return %c0_i32, %c0_i32_0 : i32, i32
  }
  func.func @transform_5(%arg0: i32) -> (i32, i32) {
    %c0_i32 = arith.constant 0 : i32
    %c0_i32_0 = arith.constant 0 : i32
    %c0_i32_1 = arith.constant 0 : i32
    return %c0_i32, %c0_i32_0 : i32, i32
  }
  func.func @transform_6(%arg0: i32) -> (i32, i32) {
    %c0_i32 = arith.constant 0 : i32
    %c0_i32_0 = arith.constant 0 : i32
    %c0_i32_1 = arith.constant 0 : i32
    return %c0_i32, %c0_i32_0 : i32, i32
  }
  func.func @transform_7(%arg0: i32) -> (i32, i32) {
    %c0_i32 = arith.constant 0 : i32
    %c0_i32_0 = arith.constant 0 : i32
    %c0_i32_1 = arith.constant 0 : i32
    return %c0_i32, %c0_i32_0 : i32, i32
  }
  func.func @transform_8(%arg0: i32) -> (i32, i32) {
    %c0_i32 = arith.constant 0 : i32
    %c0_i32_0 = arith.constant 0 : i32
    %c0_i32_1 = arith.constant 0 : i32
    return %c0_i32, %c0_i32_0 : i32, i32
  }
  func.func @transform_9(%arg0: i32) -> (i32, i32) {
    %c0_i32 = arith.constant 0 : i32
    %c0_i32_0 = arith.constant 0 : i32
    %c0_i32_1 = arith.constant 0 : i32
    return %c0_i32, %c0_i32_0 : i32, i32
  }
  func.func @transform_10(%arg0: i32) -> (i32, i32) {
    %c0_i32 = arith.constant 0 : i32
    %c0_i32_0 = arith.constant 0 : i32
    %c0_i32_1 = arith.constant 0 : i32
    return %c0_i32, %c0_i32_0 : i32, i32
  }
  func.func @transform_11(%arg0: i32) -> (i32, i32) {
    %c0_i32 = arith.constant 0 : i32
    %c0_i32_0 = arith.constant 0 : i32
    %c0_i32_1 = arith.constant 0 : i32
    return %c0_i32, %c0_i32_0 : i32, i32
  }
  func.func @transform_12(%arg0: i32) -> (i32, i32) {
    %c0_i32 = arith.constant 0 : i32
    %c0_i32_0 = arith.constant 0 : i32
    %c0_i32_1 = arith.constant 0 : i32
    return %c0_i32, %c0_i32_0 : i32, i32
  }
  func.func @transform_13(%arg0: i32) -> (i32, i32) {
    %c0_i32 = arith.constant 0 : i32
    %c0_i32_0 = arith.constant 0 : i32
    %c0_i32_1 = arith.constant 0 : i32
    return %c0_i32, %c0_i32_0 : i32, i32
  }
  func.func @transform_14(%arg0: i32) -> (i32, i32, i32) {
    %c0_i32 = arith.constant 0 : i32
    %c0_i32_0 = arith.constant 0 : i32
    %c0_i32_1 = arith.constant 0 : i32
    return %c0_i32, %arg0, %c0_i32_0 : i32, i32, i32
  }
}

</mosaic_0001>

<llo_original>
// kernel: lstm_model_forward.1
$region0: #{lstm_model_forward.1}
  #allocation0 [shape = 'u32[]', space=smem, size = 0x4, offset = 0x4, fixed_abs, tag = 'smem constant byte address 0x4 - core index']
  #allocation1 [shape = 'u32[144,128]{1,0:T(1,128)}', space=vmem, size = 0x12000, scoped, tag = 'internal scratch']
  #allocation2 [shape = 'f32[2,8,32]{2,1,0:T(8,128)}', space=vmem, size = 0x2000, scoped, tag = 'scratch operand']
  #allocation3 [shape = 'f32[2,8,128]{2,1,0:T(8,128)}', space=vmem, size = 0x2000, scoped, tag = 'scratch operand']
  %s0 = inlined_call_operand.vmem [shape: f32[2,8,4], index: 0, kind: input, shape index: {}]
  %s1 = inlined_call_operand.vmem [shape: f32[4,32], index: 1, kind: input, shape index: {}]
  %s2 = inlined_call_operand.vmem [shape: f32[1,32], index: 2, kind: input, shape index: {}]
  %s3 = inlined_call_operand.vmem [shape: f32[32,128], index: 3, kind: input, shape index: {}]
  %s4 = inlined_call_operand.hbm [shape: f32[32,128], index: 4, kind: input, shape index: {}]
  %s5 = inlined_call_operand.hbm [shape: f32[1,128], index: 5, kind: input, shape index: {}]
  %s6 = inlined_call_operand.vmem [shape: f32[32,128], index: 6, kind: input, shape index: {}]
  %s7 = inlined_call_operand.hbm [shape: f32[32,128], index: 7, kind: input, shape index: {}]
  %s8 = inlined_call_operand.hbm [shape: f32[1,128], index: 8, kind: input, shape index: {}]
  %s9 = inlined_call_operand.hbm [shape: f32[32,128], index: 9, kind: input, shape index: {}]
  %s10 = inlined_call_operand.hbm [shape: f32[32,128], index: 10, kind: input, shape index: {}]
  %s11 = inlined_call_operand.hbm [shape: f32[1,128], index: 11, kind: input, shape index: {}]
  %s12 = inlined_call_operand.hbm [shape: f32[32,128], index: 12, kind: input, shape index: {}]
  %s13 = inlined_call_operand.hbm [shape: f32[1,128], index: 13, kind: input, shape index: {}]
  %s14 = inlined_call_operand.vmem [shape: f32[2,8,128], index: 14, kind: output, shape index: {}]
  %s15 = sld [smem:[#allocation0]]
  $region102: #{lstm_model_forward.1} parent=0
    _
  %s17 = ssub.s32 1, %s15
  %s18 = scalar_select 0, %s17, %s15
  $region1: #{lstm_model_forward.1} parent=0
    #allocation4 [shape = 'u8[16384]{0}', space=vmem, size = 0x4000, scoped, tag = 'input window, operand 4, single buffered']
    #allocation5 [shape = 's32[1]{0}', space=sflag, size = 0x4, scoped, tag = 'scoped memory for lstm_model_forward.1']
    #allocation6 [shape = 'u8[512]{0}', space=vmem, size = 0x400, scoped, tag = 'input window, operand 5, single buffered']
    #allocation7 [shape = 's32[1]{0}', space=sflag, size = 0x4, scoped, tag = 'scoped memory for lstm_model_forward.1']
    #allocation8 [shape = 'u8[16384]{0}', space=vmem, size = 0x4000, scoped, tag = 'input window, operand 7, single buffered']
    #allocation9 [shape = 'u8[512]{0}', space=vmem, size = 0x400, scoped, tag = 'input window, operand 8, single buffered']
    #allocation10 [shape = 's32[1]{0}', space=sflag, size = 0x4, scoped, tag = 'scoped memory for lstm_model_forward.1']
    #allocation11 [shape = 'u8[16384]{0}', space=vmem, size = 0x4000, scoped, tag = 'input window, operand 9, single buffered']
    #allocation12 [shape = 'u8[16384]{0}', space=vmem, size = 0x4000, scoped, tag = 'input window, operand 10, single buffered']
    #allocation13 [shape = 's32[1]{0}', space=sflag, size = 0x4, scoped, tag = 'scoped memory for lstm_model_forward.1']
    #allocation14 [shape = 'u8[512]{0}', space=vmem, size = 0x400, scoped, tag = 'input window, operand 11, single buffered']
    #allocation15 [shape = 'u8[16384]{0}', space=vmem, size = 0x4000, scoped, tag = 'input window, operand 12, single buffered']
    #allocation16 [shape = 's32[1]{0}', space=sflag, size = 0x4, scoped, tag = 'scoped memory for lstm_model_forward.1']
    #allocation17 [shape = 'u8[512]{0}', space=vmem, size = 0x400, scoped, tag = 'input window, operand 13, single buffered']
    %19 = vsyncpa [#allocation5], 0
    %20 = vsyncpa [#allocation7], 0
    %21 = vsyncpa [#allocation10], 0
    %22 = vsyncpa [#allocation13], 0
    %23 = vsyncpa [#allocation16], 0
    // Predicated region
    $region2: #{lstm_model_forward.1} parent=1 // pred_check
      _
    $region3: #{lstm_model_forward.1} parent=1 // pred_check_branch
      %25 = sbr.rel (0) target = $region5
    $region4: #{lstm_model_forward.1} parent=1 // pred_region
      _
    $region5: #{lstm_model_forward.1} parent=1 // pred_fallthru
      _
    // Predicated region
    $region6: #{lstm_model_forward.1} parent=1 // pred_check
      _
    $region7: #{lstm_model_forward.1} parent=1 // pred_check_branch
      %27 = sbr.rel (0) target = $region9
    $region8: #{lstm_model_forward.1} parent=1 // pred_region
      _
    $region9: #{lstm_model_forward.1} parent=1 // pred_fallthru
      _
    // Predicated region
    $region10: #{lstm_model_forward.1} parent=1 // pred_check
      _
    $region11: #{lstm_model_forward.1} parent=1 // pred_check_branch
      %29 = sbr.rel (0) target = $region13
    $region12: #{lstm_model_forward.1} parent=1 // pred_region
      _
    $region13: #{lstm_model_forward.1} parent=1 // pred_fallthru
      _
    // Predicated region
    $region14: #{lstm_model_forward.1} parent=1 // pred_check
      _
    $region15: #{lstm_model_forward.1} parent=1 // pred_check_branch
      %31 = sbr.rel (0) target = $region17
    $region16: #{lstm_model_forward.1} parent=1 // pred_region
      _
    $region17: #{lstm_model_forward.1} parent=1 // pred_fallthru
      _
    // Predicated region
    $region18: #{lstm_model_forward.1} parent=1 // pred_check
      _
    $region19: #{lstm_model_forward.1} parent=1 // pred_check_branch
      %33 = sbr.rel (0) target = $region21
    $region20: #{lstm_model_forward.1} parent=1 // pred_region
      %s35 = ssub.s32 512, 512
      %36 = vsyncadd [#allocation5], %s35
      %s37 = sshll.u32 [#allocation4], 4
      %s38 = int_to_ptr.vmem [resolvable:$true] %s37
      %43 = dma.hbm_to_vmem [thread:$0]  %s4, 512, %s38, [#allocation5], 128, 128, 8
    $region21: #{lstm_model_forward.1} parent=1 // pred_fallthru
      _
    // Predicated region
    $region22: #{lstm_model_forward.1} parent=1 // pred_check
      _
    $region23: #{lstm_model_forward.1} parent=1 // pred_check_branch
      %45 = sbr.rel (0) target = $region25
    $region24: #{lstm_model_forward.1} parent=1 // pred_region
      %s47 = ssub.s32 16, 16
      %48 = vsyncadd [#allocation7], %s47
      %s50 = sshll.u32 [#allocation6], 4
      %s51 = int_to_ptr.vmem [resolvable:$true] %s50
      %53 = dma.hbm_to_vmem [thread:$0]  %s5, 16, %s51, [#allocation7]
    $region25: #{lstm_model_forward.1} parent=1 // pred_fallthru
      _
    // Predicated region
    $region26: #{lstm_model_forward.1} parent=1 // pred_check
      _
    $region27: #{lstm_model_forward.1} parent=1 // pred_check_branch
      %55 = sbr.rel (0) target = $region29
    $region28: #{lstm_model_forward.1} parent=1 // pred_region
      _
    $region29: #{lstm_model_forward.1} parent=1 // pred_fallthru
      _
    // Predicated region
    $region30: #{lstm_model_forward.1} parent=1 // pred_check
      _
    $region31: #{lstm_model_forward.1} parent=1 // pred_check_branch
      %57 = sbr.rel (0) target = $region33
    $region32: #{lstm_model_forward.1} parent=1 // pred_region
      %s59 = ssub.s32 512, 512
      %60 = vsyncadd [#allocation7], %s59
      %s61 = sshll.u32 [#allocation8], 4
      %s62 = int_to_ptr.vmem [resolvable:$true] %s61
      %67 = dma.hbm_to_vmem [thread:$0]  %s7, 512, %s62, [#allocation7], 128, 128, 8
    $region33: #{lstm_model_forward.1} parent=1 // pred_fallthru
      _
    // Predicated region
    $region34: #{lstm_model_forward.1} parent=1 // pred_check
      _
    $region35: #{lstm_model_forward.1} parent=1 // pred_check_branch
      %69 = sbr.rel (0) target = $region37
    $region36: #{lstm_model_forward.1} parent=1 // pred_region
      %s71 = ssub.s32 16, 16
      %72 = vsyncadd [#allocation10], %s71
      %s74 = sshll.u32 [#allocation9], 4
      %s75 = int_to_ptr.vmem [resolvable:$true] %s74
      %77 = dma.hbm_to_vmem [thread:$0]  %s8, 16, %s75, [#allocation10]
    $region37: #{lstm_model_forward.1} parent=1 // pred_fallthru
      _
    // Predicated region
    $region38: #{lstm_model_forward.1} parent=1 // pred_check
      _
    $region39: #{lstm_model_forward.1} parent=1 // pred_check_branch
      %79 = sbr.rel (0) target = $region41
    $region40: #{lstm_model_forward.1} parent=1 // pred_region
      %s81 = ssub.s32 512, 512
      %82 = vsyncadd [#allocation10], %s81
      %s83 = sshll.u32 [#allocation11], 4
      %s84 = int_to_ptr.vmem [resolvable:$true] %s83
      %89 = dma.hbm_to_vmem [thread:$0]  %s9, 512, %s84, [#allocation10], 128, 128, 8
    $region41: #{lstm_model_forward.1} parent=1 // pred_fallthru
      _
    // Predicated region
    $region42: #{lstm_model_forward.1} parent=1 // pred_check
      _
    $region43: #{lstm_model_forward.1} parent=1 // pred_check_branch
      %91 = sbr.rel (0) target = $region45
    $region44: #{lstm_model_forward.1} parent=1 // pred_region
      %s93 = ssub.s32 512, 512
      %94 = vsyncadd [#allocation13], %s93
      %s95 = sshll.u32 [#allocation12], 4
      %s96 = int_to_ptr.vmem [resolvable:$true] %s95
      %101 = dma.hbm_to_vmem [thread:$0]  %s10, 512, %s96, [#allocation13], 128, 128, 8
    $region45: #{lstm_model_forward.1} parent=1 // pred_fallthru
      _
    // Predicated region
    $region46: #{lstm_model_forward.1} parent=1 // pred_check
      _
    $region47: #{lstm_model_forward.1} parent=1 // pred_check_branch
      %103 = sbr.rel (0) target = $region49
    $region48: #{lstm_model_forward.1} parent=1 // pred_region
      %s105 = ssub.s32 16, 16
      %106 = vsyncadd [#allocation13], %s105
      %s108 = sshll.u32 [#allocation14], 4
      %s109 = int_to_ptr.vmem [resolvable:$true] %s108
      %111 = dma.hbm_to_vmem [thread:$0]  %s11, 16, %s109, [#allocation13]
    $region49: #{lstm_model_forward.1} parent=1 // pred_fallthru
      _
    // Predicated region
    $region50: #{lstm_model_forward.1} parent=1 // pred_check
      _
    $region51: #{lstm_model_forward.1} parent=1 // pred_check_branch
      %113 = sbr.rel (0) target = $region53
    $region52: #{lstm_model_forward.1} parent=1 // pred_region
      %s115 = ssub.s32 512, 512
      %116 = vsyncadd [#allocation16], %s115
      %s117 = sshll.u32 [#allocation15], 4
      %s118 = int_to_ptr.vmem [resolvable:$true] %s117
      %123 = dma.hbm_to_vmem [thread:$0]  %s12, 512, %s118, [#allocation16], 128, 128, 8
    $region53: #{lstm_model_forward.1} parent=1 // pred_fallthru
      _
    // Predicated region
    $region54: #{lstm_model_forward.1} parent=1 // pred_check
      _
    $region55: #{lstm_model_forward.1} parent=1 // pred_check_branch
      %125 = sbr.rel (0) target = $region57
    $region56: #{lstm_model_forward.1} parent=1 // pred_region
      %s127 = ssub.s32 16, 16
      %128 = vsyncadd [#allocation16], %s127
      %s130 = sshll.u32 [#allocation17], 4
      %s131 = int_to_ptr.vmem [resolvable:$true] %s130
      %133 = dma.hbm_to_vmem [thread:$0]  %s13, 16, %s131, [#allocation16]
    $region57: #{lstm_model_forward.1} parent=1 // pred_fallthru
      _
    // Predicated region
    $region58: #{lstm_model_forward.1} parent=1 // pred_check
      _
    $region59: #{lstm_model_forward.1} parent=1 // pred_check_branch
      %135 = sbr.rel (0) target = $region61
    $region60: #{lstm_model_forward.1} parent=1 // pred_region
      %136 = dma.done [#allocation5], 512
    $region61: #{lstm_model_forward.1} parent=1 // pred_fallthru
      _
    // Predicated region
    $region62: #{lstm_model_forward.1} parent=1 // pred_check
      _
    $region63: #{lstm_model_forward.1} parent=1 // pred_check_branch
      %138 = sbr.rel (0) target = $region65
    $region64: #{lstm_model_forward.1} parent=1 // pred_region
      %139 = dma.done [#allocation7], 16
    $region65: #{lstm_model_forward.1} parent=1 // pred_fallthru
      _
    // Predicated region
    $region66: #{lstm_model_forward.1} parent=1 // pred_check
      _
    $region67: #{lstm_model_forward.1} parent=1 // pred_check_branch
      %141 = sbr.rel (0) target = $region69
    $region68: #{lstm_model_forward.1} parent=1 // pred_region
      %142 = dma.done [#allocation7], 512
    $region69: #{lstm_model_forward.1} parent=1 // pred_fallthru
      _
    // Predicated region
    $region70: #{lstm_model_forward.1} parent=1 // pred_check
      _
    $region71: #{lstm_model_forward.1} parent=1 // pred_check_branch
      %144 = sbr.rel (0) target = $region73
    $region72: #{lstm_model_forward.1} parent=1 // pred_region
      %145 = dma.done [#allocation10], 16
    $region73: #{lstm_model_forward.1} parent=1 // pred_fallthru
      _
    // Predicated region
    $region74: #{lstm_model_forward.1} parent=1 // pred_check
      _
    $region75: #{lstm_model_forward.1} parent=1 // pred_check_branch
      %147 = sbr.rel (0) target = $region77
    $region76: #{lstm_model_forward.1} parent=1 // pred_region
      %148 = dma.done [#allocation10], 512
    $region77: #{lstm_model_forward.1} parent=1 // pred_fallthru
      _
    // Predicated region
    $region78: #{lstm_model_forward.1} parent=1 // pred_check
      _
    $region79: #{lstm_model_forward.1} parent=1 // pred_check_branch
      %150 = sbr.rel (0) target = $region81
    $region80: #{lstm_model_forward.1} parent=1 // pred_region
      %151 = dma.done [#allocation13], 512
    $region81: #{lstm_model_forward.1} parent=1 // pred_fallthru
      _
    // Predicated region
    $region82: #{lstm_model_forward.1} parent=1 // pred_check
      _
    $region83: #{lstm_model_forward.1} parent=1 // pred_check_branch
      %153 = sbr.rel (0) target = $region85
    $region84: #{lstm_model_forward.1} parent=1 // pred_region
      %154 = dma.done [#allocation13], 16
    $region85: #{lstm_model_forward.1} parent=1 // pred_fallthru
      _
    // Predicated region
    $region86: #{lstm_model_forward.1} parent=1 // pred_check
      _
    $region87: #{lstm_model_forward.1} parent=1 // pred_check_branch
      %156 = sbr.rel (0) target = $region89
    $region88: #{lstm_model_forward.1} parent=1 // pred_region
      %157 = dma.done [#allocation16], 512
    $region89: #{lstm_model_forward.1} parent=1 // pred_fallthru
      _
    // Predicated region
    $region90: #{lstm_model_forward.1} parent=1 // pred_check
      _
    $region91: #{lstm_model_forward.1} parent=1 // pred_check_branch
      %159 = sbr.rel (0) target = $region93
    $region92: #{lstm_model_forward.1} parent=1 // pred_region
      %160 = dma.done [#allocation16], 16
    $region93: #{lstm_model_forward.1} parent=1 // pred_fallthru
      _
    %v161 = vld [vmem:[%s0] sm:$0xff]
    %v162 = vld [vmem:[%s0 + $0x8] sm:$0xff]
    %v163 = vld [vmem:[%s1] sm:$0xf]
    %v164 = vld [vmem:[%s2] sm:$0x1]
    %v166 = vlaneseq
    %v167 = vshrl.u32 %v166, 7
    %v168 = vsub.s32 0, %v167
    %v169 = vrot.slane %v164, %v168
    %vm171 = vcmask 31744
    %v173 = vsel %vm171, %v161, 0
    %v176 = vsel %vm171, %v162, 0
    %vm178 = vcmask 1043456
    %v180 = vsel %vm178, %v163, 0
    %182 = vmatprep.subr.mxu0 0.0
    %183 = vmatpush1.msra.mxu0 %v180
    %184 = vmatprep.subr.mxu0 0.0
    %185 = vmatpush1.msra.mxu0 0.0
    %186 = vmatprep.subr.mxu0 0.0
    %187 = vmatpush1.msra.mxu0 0.0
    %188 = vmatprep.subr.mxu0 0.0
    %189 = vmatpush1.msra.mxu0 0.0
    %190 = vmatprep.subr.mxu0 0.0
    %191 = vmatpush1.msra.mxu0 0.0
    %192 = vmatprep.subr.mxu0 0.0
    %193 = vmatpush1.msra.mxu0 0.0
    %194 = vmatprep.subr.mxu0 0.0
    %195 = vmatpush1.msra.mxu0 0.0
    %196 = vmatprep.subr.mxu0 0.0
    %197 = vmatpush1.msra.mxu0 0.0
    %198 = vmatprep.subr.mxu0 0.0
    %199 = vmatpush1.msra.mxu0 0.0
    %200 = vmatprep.subr.mxu0 0.0
    %201 = vmatpush1.msra.mxu0 0.0
    %202 = vmatprep.subr.mxu0 0.0
    %203 = vmatpush1.msra.mxu0 0.0
    %204 = vmatprep.subr.mxu0 0.0
    %205 = vmatpush1.msra.mxu0 0.0
    %206 = vmatprep.subr.mxu0 0.0
    %207 = vmatpush1.msra.mxu0 0.0
    %208 = vmatprep.subr.mxu0 0.0
    %209 = vmatpush1.msra.mxu0 0.0
    %210 = vmatprep.subr.mxu0 0.0
    %211 = vmatpush1.msra.mxu0 0.0
    %212 = vmatprep.subr.mxu0 0.0
    %213 = vmatpush1.msra.mxu0 0.0
    %214 = vmatprep.subr.mxu0 0.0
    %215 = vmatpush1.msra.mxu0 0.0
    %216 = vmatprep.subr.mxu0 0.0
    %217 = vmatpush1.msra.mxu0 0.0
    %218 = vmatprep.subr.mxu0 0.0
    %219 = vmatpush1.msra.mxu0 0.0
    %220 = vmatprep.subr.mxu0 0.0
    %221 = vmatpush1.msra.mxu0 0.0
    %222 = vmatprep.subr.mxu0 0.0
    %223 = vmatpush1.msra.mxu0 0.0
    %224 = vmatprep.subr.mxu0 0.0
    %225 = vmatpush1.msra.mxu0 0.0
    %226 = vmatprep.subr.mxu0 0.0
    %227 = vmatpush1.msra.mxu0 0.0
    %228 = vmatprep.subr.mxu0 0.0
    %229 = vmatpush1.msra.mxu0 0.0
    %230 = vmatprep.subr.mxu0 0.0
    %231 = vmatpush1.msra.mxu0 0.0
    %232 = vmatprep.subr.mxu0 0.0
    %233 = vmatpush1.msra.mxu0 0.0
    %234 = vmatprep.subr.mxu0 0.0
    %235 = vmatpush1.msra.mxu0 0.0
    %236 = vmatprep.subr.mxu0 0.0
    %237 = vmatpush1.msra.mxu0 0.0
    %238 = vmatprep.subr.mxu0 0.0
    %239 = vmatpush1.msra.mxu0 0.0
    %240 = vmatprep.subr.mxu0 0.0
    %241 = vmatpush1.msra.mxu0 0.0
    %242 = vmatprep.subr.mxu0 0.0
    %243 = vmatpush1.msra.mxu0 0.0
    %244 = vmatprep.subr.mxu0 0.0
    %245 = vmatpush1.msra.mxu0 0.0
    %246 = vmatprep.mubr.f32.mxu0 0.0
    %247 = vmatmul.mubr.f32.gmra.mrb[0].mxu0 %v173
    %v248 = vpop.f32.mrb[0].mxu0
    %v249 = vadd.f32 %v169, %v248
    %v250 = vpop.f32.mrb[0].mxu0
    %251 = vmatprep.mubr.f32.mxu0 0.0
    %252 = vmatmul.mubr.f32.gmra.mrb[0].mxu0 %v176
    %v253 = vpop.f32.mrb[0].mxu0
    %v254 = vadd.f32 %v169, %v253
    %v255 = vpop.f32.mrb[0].mxu0
    %256 = vdwg.mxu0
    %v257 = vmax.f32 %v249, 0.0
    %v258 = vmax.f32 %v254, 0.0
    %vm259 = vcmask 261120
    %260 = vst.msk [vmem:[#allocation2] sm:$0xff] %vm259, %v257
    %261 = vst.msk [vmem:[#allocation2 + $0x8] sm:$0xff] %vm259, %v258
    %v262 = vld [vmem:[#allocation6] sm:$0x1]
    %v263 = vld [vmem:[#allocation4] sm:$0xff]
    %v264 = vld [vmem:[#allocation4 + $0x8] sm:$0xff]
    %v265 = vld [vmem:[#allocation4 + $0x10] sm:$0xff]
    %v266 = vld [vmem:[#allocation4 + $0x18] sm:$0xff]
    %v267 = vld [vmem:[#allocation2] sm:$0xff]
    %v268 = vld [vmem:[#allocation2 + $0x8] sm:$0xff]
    %v269 = vld [vmem:[%s3] sm:$0xff]
    %v270 = vld [vmem:[%s3 + $0x8] sm:$0xff]
    %v271 = vld [vmem:[%s3 + $0x10] sm:$0xff]
    %v272 = vld [vmem:[%s3 + $0x18] sm:$0xff]
    %v274 = vlaneseq
    %v275 = vshrl.u32 %v274, 7
    %v276 = vsub.s32 0, %v275
    %v277 = vrot.slane %v262, %v276
    %v280 = vsel %vm259, %v267, 0
    %v283 = vsel %vm259, %v268, 0
    %285 = vmatprep.subr.mxu0 0.0
    %286 = vmatpush1.msra.mxu0 %v269
    %287 = vmatprep.subr.mxu0 0.0
    %288 = vmatpush1.msra.mxu0 %v270
    %289 = vmatprep.subr.mxu0 0.0
    %290 = vmatpush1.msra.mxu0 %v271
    %291 = vmatprep.subr.mxu0 0.0
    %292 = vmatpush1.msra.mxu0 %v272
    %293 = vmatprep.subr.mxu0 0.0
    %294 = vmatpush1.msra.mxu0 0.0
    %295 = vmatprep.subr.mxu0 0.0
    %296 = vmatpush1.msra.mxu0 0.0
    %297 = vmatprep.subr.mxu0 0.0
    %298 = vmatpush1.msra.mxu0 0.0
    %299 = vmatprep.subr.mxu0 0.0
    %300 = vmatpush1.msra.mxu0 0.0
    %301 = vmatprep.subr.mxu0 0.0
    %302 = vmatpush1.msra.mxu0 0.0
    %303 = vmatprep.subr.mxu0 0.0
    %304 = vmatpush1.msra.mxu0 0.0
    %305 = vmatprep.subr.mxu0 0.0
    %306 = vmatpush1.msra.mxu0 0.0
    %307 = vmatprep.subr.mxu0 0.0
    %308 = vmatpush1.msra.mxu0 0.0
    %309 = vmatprep.subr.mxu0 0.0
    %310 = vmatpush1.msra.mxu0 0.0
    %311 = vmatprep.subr.mxu0 0.0
    %312 = vmatpush1.msra.mxu0 0.0
    %313 = vmatprep.subr.mxu0 0.0
    %314 = vmatpush1.msra.mxu0 0.0
    %315 = vmatprep.subr.mxu0 0.0
    %316 = vmatpush1.msra.mxu0 0.0
    %317 = vmatprep.subr.mxu0 0.0
    %318 = vmatpush1.msra.mxu0 0.0
    %319 = vmatprep.subr.mxu0 0.0
    %320 = vmatpush1.msra.mxu0 0.0
    %321 = vmatprep.subr.mxu0 0.0
    %322 = vmatpush1.msra.mxu0 0.0
    %323 = vmatprep.subr.mxu0 0.0
    %324 = vmatpush1.msra.mxu0 0.0
    %325 = vmatprep.subr.mxu0 0.0
    %326 = vmatpush1.msra.mxu0 0.0
    %327 = vmatprep.subr.mxu0 0.0
    %328 = vmatpush1.msra.mxu0 0.0
    %329 = vmatprep.subr.mxu0 0.0
    %330 = vmatpush1.msra.mxu0 0.0
    %331 = vmatprep.subr.mxu0 0.0
    %332 = vmatpush1.msra.mxu0 0.0
    %333 = vmatprep.subr.mxu0 0.0
    %334 = vmatpush1.msra.mxu0 0.0
    %335 = vmatprep.subr.mxu0 0.0
    %336 = vmatpush1.msra.mxu0 0.0
    %337 = vmatprep.subr.mxu0 0.0
    %338 = vmatpush1.msra.mxu0 0.0
    %339 = vmatprep.subr.mxu0 0.0
    %340 = vmatpush1.msra.mxu0 0.0
    %341 = vmatprep.subr.mxu0 0.0
    %342 = vmatpush1.msra.mxu0 0.0
    %343 = vmatprep.subr.mxu0 0.0
    %344 = vmatpush1.msra.mxu0 0.0
    %345 = vmatprep.subr.mxu0 0.0
    %346 = vmatpush1.msra.mxu0 0.0
    %347 = vmatprep.subr.mxu0 0.0
    %348 = vmatpush1.msra.mxu0 0.0
    %349 = vmatprep.mubr.f32.mxu0 0.0
    %350 = vmatmul.mubr.f32.gmra.mrb[0].mxu0 %v280
    %v351 = vpop.f32.mrb[0].mxu0
    %v352 = vadd.f32 %v277, %v351
    %v353 = vpop.f32.mrb[0].mxu0
    %354 = vmatprep.mubr.f32.mxu0 0.0
    %355 = vmatmul.mubr.f32.gmra.mrb[0].mxu0 %v283
    %v356 = vpop.f32.mrb[0].mxu0
    %v357 = vadd.f32 %v277, %v356
    %v358 = vpop.f32.mrb[0].mxu0
    %359 = vdwg.mxu0
    %360 = vst [vmem:[#allocation3] sm:$0xff] %v352
    %361 = vst [vmem:[#allocation3 + $0x8] sm:$0xff] %v357
    %v362 = vld [vmem:[#allocation3] sm:$0xff]
    %v364 = vsel %vm259, 0.0, 0
    %366 = vmatprep.subr.mxu0 0.0
    %367 = vmatpush1.msra.mxu0 %v263
    %368 = vmatprep.subr.mxu0 0.0
    %369 = vmatpush1.msra.mxu0 %v264
    %370 = vmatprep.subr.mxu0 0.0
    %371 = vmatpush1.msra.mxu0 %v265
    %372 = vmatprep.subr.mxu0 0.0
    %373 = vmatpush1.msra.mxu0 %v266
    %374 = vmatprep.subr.mxu0 0.0
    %375 = vmatpush1.msra.mxu0 0.0
    %376 = vmatprep.subr.mxu0 0.0
    %377 = vmatpush1.msra.mxu0 0.0
    %378 = vmatprep.subr.mxu0 0.0
    %379 = vmatpush1.msra.mxu0 0.0
    %380 = vmatprep.subr.mxu0 0.0
    %381 = vmatpush1.msra.mxu0 0.0
    %382 = vmatprep.subr.mxu0 0.0
    %383 = vmatpush1.msra.mxu0 0.0
    %384 = vmatprep.subr.mxu0 0.0
    %385 = vmatpush1.msra.mxu0 0.0
    %386 = vmatprep.subr.mxu0 0.0
    %387 = vmatpush1.msra.mxu0 0.0
    %388 = vmatprep.subr.mxu0 0.0
    %389 = vmatpush1.msra.mxu0 0.0
    %390 = vmatprep.subr.mxu0 0.0
    %391 = vmatpush1.msra.mxu0 0.0
    %392 = vmatprep.subr.mxu0 0.0
    %393 = vmatpush1.msra.mxu0 0.0
    %394 = vmatprep.subr.mxu0 0.0
    %395 = vmatpush1.msra.mxu0 0.0
    %396 = vmatprep.subr.mxu0 0.0
    %397 = vmatpush1.msra.mxu0 0.0
    %398 = vmatprep.subr.mxu0 0.0
    %399 = vmatpush1.msra.mxu0 0.0
    %400 = vmatprep.subr.mxu0 0.0
    %401 = vmatpush1.msra.mxu0 0.0
    %402 = vmatprep.subr.mxu0 0.0
    %403 = vmatpush1.msra.mxu0 0.0
    %404 = vmatprep.subr.mxu0 0.0
    %405 = vmatpush1.msra.mxu0 0.0
    %406 = vmatprep.subr.mxu0 0.0
    %407 = vmatpush1.msra.mxu0 0.0
    %408 = vmatprep.subr.mxu0 0.0
    %409 = vmatpush1.msra.mxu0 0.0
    %410 = vmatprep.subr.mxu0 0.0
    %411 = vmatpush1.msra.mxu0 0.0
    %412 = vmatprep.subr.mxu0 0.0
    %413 = vmatpush1.msra.mxu0 0.0
    %414 = vmatprep.subr.mxu0 0.0
    %415 = vmatpush1.msra.mxu0 0.0
    %416 = vmatprep.subr.mxu0 0.0
    %417 = vmatpush1.msra.mxu0 0.0
    %418 = vmatprep.subr.mxu0 0.0
    %419 = vmatpush1.msra.mxu0 0.0
    %420 = vmatprep.subr.mxu0 0.0
    %421 = vmatpush1.msra.mxu0 0.0
    %422 = vmatprep.subr.mxu0 0.0
    %423 = vmatpush1.msra.mxu0 0.0
    %424 = vmatprep.subr.mxu0 0.0
    %425 = vmatpush1.msra.mxu0 0.0
    %426 = vmatprep.subr.mxu0 0.0
    %427 = vmatpush1.msra.mxu0 0.0
    %428 = vmatprep.subr.mxu0 0.0
    %429 = vmatpush1.msra.mxu0 0.0
    %430 = vmatprep.mubr.f32.mxu0 0.0
    %431 = vmatmul.mubr.f32.gmra.mrb[0].mxu0 %v364
    %v432 = vpop.f32.mrb[0].mxu0
    %v433 = vadd.f32 0.0, %v432
    %v434 = vpop.f32.mrb[0].mxu0
    %435 = vdwg.mxu0
    %v436 = vadd.f32 %v362, %v433
    %v437 = vxor.u32 %v436, 2147483648
    %v438 = vmul.f32 %v437, 1.442695
    %v439 = vpow.pop %v438
    %v440 = vadd.f32 %v439, 1.0
    %v441 = vrcp.pop %v440
    %v442 = vmul.f32 1.0, %v441
    %v443 = vtanh.pop %v436
    %v444 = vmul.f32 %v442, 0.0
    %446 = vrot.lane.b32.xlu0 %v443, 64
    %v447 = vpop.permute.xlu0 %446
    %v449 = vmul.f32 %v442, %v447
    %451 = vrot.lane.b32.xlu0 %v449, 32
    %v452 = vpop.permute.xlu0 %451
    %v454 = vadd.f32 %v444, %v452
    %v455 = vtanh.pop %v454
    %457 = vrot.lane.b32.xlu0 %v455, 64
    %v458 = vpop.permute.xlu0 %457
    %v460 = vmul.f32 %v442, %v458
    %v461 = vld [vmem:[#allocation2] sm:$0xff]
    %463 = vrot.lane.b32.xlu0 %v460, 32
    %v464 = vpop.permute.xlu0 %463
    %v466 = vadd.f32 %v461, %v464
    %467 = vst.msk [vmem:[#allocation2] sm:$0xff] %vm259, %v466
    %s468 = scalar_lea.vmem [#allocation3], 8
    %v469 = vld [vmem:[%s468] sm:$0xff]
    %v470 = vsel %vm259, %v464, 0
    %472 = vmatprep.subr.mxu0 0.0
    %473 = vmatpush1.msra.mxu0 %v263
    %474 = vmatprep.subr.mxu0 0.0
    %475 = vmatpush1.msra.mxu0 %v264
    %476 = vmatprep.subr.mxu0 0.0
    %477 = vmatpush1.msra.mxu0 %v265
    %478 = vmatprep.subr.mxu0 0.0
    %479 = vmatpush1.msra.mxu0 %v266
    %480 = vmatprep.subr.mxu0 0.0
    %481 = vmatpush1.msra.mxu0 0.0
    %482 = vmatprep.subr.mxu0 0.0
    %483 = vmatpush1.msra.mxu0 0.0
    %484 = vmatprep.subr.mxu0 0.0
    %485 = vmatpush1.msra.mxu0 0.0
    %486 = vmatprep.subr.mxu0 0.0
    %487 = vmatpush1.msra.mxu0 0.0
    %488 = vmatprep.subr.mxu0 0.0
    %489 = vmatpush1.msra.mxu0 0.0
    %490 = vmatprep.subr.mxu0 0.0
    %491 = vmatpush1.msra.mxu0 0.0
    %492 = vmatprep.subr.mxu0 0.0
    %493 = vmatpush1.msra.mxu0 0.0
    %494 = vmatprep.subr.mxu0 0.0
    %495 = vmatpush1.msra.mxu0 0.0
    %496 = vmatprep.subr.mxu0 0.0
    %497 = vmatpush1.msra.mxu0 0.0
    %498 = vmatprep.subr.mxu0 0.0
    %499 = vmatpush1.msra.mxu0 0.0
    %500 = vmatprep.subr.mxu0 0.0
    %501 = vmatpush1.msra.mxu0 0.0
    %502 = vmatprep.subr.mxu0 0.0
    %503 = vmatpush1.msra.mxu0 0.0
    %504 = vmatprep.subr.mxu0 0.0
    %505 = vmatpush1.msra.mxu0 0.0
    %506 = vmatprep.subr.mxu0 0.0
    %507 = vmatpush1.msra.mxu0 0.0
    %508 = vmatprep.subr.mxu0 0.0
    %509 = vmatpush1.msra.mxu0 0.0
    %510 = vmatprep.subr.mxu0 0.0
    %511 = vmatpush1.msra.mxu0 0.0
    %512 = vmatprep.subr.mxu0 0.0
    %513 = vmatpush1.msra.mxu0 0.0
    %514 = vmatprep.subr.mxu0 0.0
    %515 = vmatpush1.msra.mxu0 0.0
    %516 = vmatprep.subr.mxu0 0.0
    %517 = vmatpush1.msra.mxu0 0.0
    %518 = vmatprep.subr.mxu0 0.0
    %519 = vmatpush1.msra.mxu0 0.0
    %520 = vmatprep.subr.mxu0 0.0
    %521 = vmatpush1.msra.mxu0 0.0
    %522 = vmatprep.subr.mxu0 0.0
    %523 = vmatpush1.msra.mxu0 0.0
    %524 = vmatprep.subr.mxu0 0.0
    %525 = vmatpush1.msra.mxu0 0.0
    %526 = vmatprep.subr.mxu0 0.0
    %527 = vmatpush1.msra.mxu0 0.0
    %528 = vmatprep.subr.mxu0 0.0
    %529 = vmatpush1.msra.mxu0 0.0
    %530 = vmatprep.subr.mxu0 0.0
    %531 = vmatpush1.msra.mxu0 0.0
    %532 = vmatprep.subr.mxu0 0.0
    %533 = vmatpush1.msra.mxu0 0.0
    %534 = vmatprep.subr.mxu0 0.0
    %535 = vmatpush1.msra.mxu0 0.0
    %536 = vmatprep.mubr.f32.mxu0 0.0
    %537 = vmatmul.mubr.f32.gmra.mrb[0].mxu0 %v470
    %v538 = vpop.f32.mrb[0].mxu0
    %v539 = vadd.f32 0.0, %v538
    %v540 = vpop.f32.mrb[0].mxu0
    %541 = vdwg.mxu0
    %v542 = vadd.f32 %v469, %v539
    %v543 = vxor.u32 %v542, 2147483648
    %v544 = vmul.f32 %v543, 1.442695
    %v545 = vpow.pop %v544
    %v546 = vadd.f32 %v545, 1.0
    %v547 = vrcp.pop %v546
    %v548 = vmul.f32 1.0, %v547
    %v549 = vtanh.pop %v542
    %v550 = vmul.f32 %v548, %v454
    %552 = vrot.lane.b32.xlu0 %v549, 64
    %v553 = vpop.permute.xlu0 %552
    %v555 = vmul.f32 %v548, %v553
    %557 = vrot.lane.b32.xlu0 %v555, 32
    %v558 = vpop.permute.xlu0 %557
    %v560 = vadd.f32 %v550, %v558
    %v561 = vtanh.pop %v560
    %563 = vrot.lane.b32.xlu0 %v561, 64
    %v564 = vpop.permute.xlu0 %563
    %v566 = vmul.f32 %v548, %v564
    %s567 = scalar_lea.vmem [#allocation2], 8
    %v568 = vld [vmem:[%s567] sm:$0xff]
    %570 = vrot.lane.b32.xlu0 %v566, 32
    %v571 = vpop.permute.xlu0 %570
    %v573 = vadd.f32 %v568, %v571
    %574 = vst.msk [vmem:[%s567] sm:$0xff] %vm259, %v573
    %v575 = vld [vmem:[#allocation9] sm:$0x1]
    %v576 = vld [vmem:[#allocation8] sm:$0xff]
    %v577 = vld [vmem:[#allocation8 + $0x8] sm:$0xff]
    %v578 = vld [vmem:[#allocation8 + $0x10] sm:$0xff]
    %v579 = vld [vmem:[#allocation8 + $0x18] sm:$0xff]
    %v580 = vld [vmem:[#allocation2] sm:$0xff]
    %v581 = vld [vmem:[#allocation2 + $0x8] sm:$0xff]
    %v582 = vld [vmem:[%s6] sm:$0xff]
    %v583 = vld [vmem:[%s6 + $0x8] sm:$0xff]
    %v584 = vld [vmem:[%s6 + $0x10] sm:$0xff]
    %v585 = vld [vmem:[%s6 + $0x18] sm:$0xff]
    %v587 = vlaneseq
    %v588 = vshrl.u32 %v587, 7
    %v589 = vsub.s32 0, %v588
    %v590 = vrot.slane %v575, %v589
    %v593 = vsel %vm259, %v580, 0
    %v596 = vsel %vm259, %v581, 0
    %598 = vmatprep.subr.mxu0 0.0
    %599 = vmatpush1.msra.mxu0 %v582
    %600 = vmatprep.subr.mxu0 0.0
    %601 = vmatpush1.msra.mxu0 %v583
    %602 = vmatprep.subr.mxu0 0.0
    %603 = vmatpush1.msra.mxu0 %v584
    %604 = vmatprep.subr.mxu0 0.0
    %605 = vmatpush1.msra.mxu0 %v585
    %606 = vmatprep.subr.mxu0 0.0
    %607 = vmatpush1.msra.mxu0 0.0
    %608 = vmatprep.subr.mxu0 0.0
    %609 = vmatpush1.msra.mxu0 0.0
    %610 = vmatprep.subr.mxu0 0.0
    %611 = vmatpush1.msra.mxu0 0.0
    %612 = vmatprep.subr.mxu0 0.0
    %613 = vmatpush1.msra.mxu0 0.0
    %614 = vmatprep.subr.mxu0 0.0
    %615 = vmatpush1.msra.mxu0 0.0
    %616 = vmatprep.subr.mxu0 0.0
    %617 = vmatpush1.msra.mxu0 0.0
    %618 = vmatprep.subr.mxu0 0.0
    %619 = vmatpush1.msra.mxu0 0.0
    %620 = vmatprep.subr.mxu0 0.0
    %621 = vmatpush1.msra.mxu0 0.0
    %622 = vmatprep.subr.mxu0 0.0
    %623 = vmatpush1.msra.mxu0 0.0
    %624 = vmatprep.subr.mxu0 0.0
    %625 = vmatpush1.msra.mxu0 0.0
    %626 = vmatprep.subr.mxu0 0.0
    %627 = vmatpush1.msra.mxu0 0.0
    %628 = vmatprep.subr.mxu0 0.0
    %629 = vmatpush1.msra.mxu0 0.0
    %630 = vmatprep.subr.mxu0 0.0
    %631 = vmatpush1.msra.mxu0 0.0
    %632 = vmatprep.subr.mxu0 0.0
    %633 = vmatpush1.msra.mxu0 0.0
    %634 = vmatprep.subr.mxu0 0.0
    %635 = vmatpush1.msra.mxu0 0.0
    %636 = vmatprep.subr.mxu0 0.0
    %637 = vmatpush1.msra.mxu0 0.0
    %638 = vmatprep.subr.mxu0 0.0
    %639 = vmatpush1.msra.mxu0 0.0
    %640 = vmatprep.subr.mxu0 0.0
    %641 = vmatpush1.msra.mxu0 0.0
    %642 = vmatprep.subr.mxu0 0.0
    %643 = vmatpush1.msra.mxu0 0.0
    %644 = vmatprep.subr.mxu0 0.0
    %645 = vmatpush1.msra.mxu0 0.0
    %646 = vmatprep.subr.mxu0 0.0
    %647 = vmatpush1.msra.mxu0 0.0
    %648 = vmatprep.subr.mxu0 0.0
    %649 = vmatpush1.msra.mxu0 0.0
    %650 = vmatprep.subr.mxu0 0.0
    %651 = vmatpush1.msra.mxu0 0.0
    %652 = vmatprep.subr.mxu0 0.0
    %653 = vmatpush1.msra.mxu0 0.0
    %654 = vmatprep.subr.mxu0 0.0
    %655 = vmatpush1.msra.mxu0 0.0
    %656 = vmatprep.subr.mxu0 0.0
    %657 = vmatpush1.msra.mxu0 0.0
    %658 = vmatprep.subr.mxu0 0.0
    %659 = vmatpush1.msra.mxu0 0.0
    %660 = vmatprep.subr.mxu0 0.0
    %661 = vmatpush1.msra.mxu0 0.0
    %662 = vmatprep.mubr.f32.mxu0 0.0
    %663 = vmatmul.mubr.f32.gmra.mrb[0].mxu0 %v593
    %v664 = vpop.f32.mrb[0].mxu0
    %v665 = vadd.f32 %v590, %v664
    %v666 = vpop.f32.mrb[0].mxu0
    %667 = vmatprep.mubr.f32.mxu0 0.0
    %668 = vmatmul.mubr.f32.gmra.mrb[0].mxu0 %v596
    %v669 = vpop.f32.mrb[0].mxu0
    %v670 = vadd.f32 %v590, %v669
    %v671 = vpop.f32.mrb[0].mxu0
    %672 = vdwg.mxu0
    %673 = vst [vmem:[#allocation3] sm:$0xff] %v665
    %674 = vst [vmem:[#allocation3 + $0x8] sm:$0xff] %v670
    %v675 = vld [vmem:[#allocation3] sm:$0xff]
    %676 = vmatprep.subr.mxu0 0.0
    %677 = vmatpush1.msra.mxu0 %v576
    %678 = vmatprep.subr.mxu0 0.0
    %679 = vmatpush1.msra.mxu0 %v577
    %680 = vmatprep.subr.mxu0 0.0
    %681 = vmatpush1.msra.mxu0 %v578
    %682 = vmatprep.subr.mxu0 0.0
    %683 = vmatpush1.msra.mxu0 %v579
    %684 = vmatprep.subr.mxu0 0.0
    %685 = vmatpush1.msra.mxu0 0.0
    %686 = vmatprep.subr.mxu0 0.0
    %687 = vmatpush1.msra.mxu0 0.0
    %688 = vmatprep.subr.mxu0 0.0
    %689 = vmatpush1.msra.mxu0 0.0
    %690 = vmatprep.subr.mxu0 0.0
    %691 = vmatpush1.msra.mxu0 0.0
    %692 = vmatprep.subr.mxu0 0.0
    %693 = vmatpush1.msra.mxu0 0.0
    %694 = vmatprep.subr.mxu0 0.0
    %695 = vmatpush1.msra.mxu0 0.0
    %696 = vmatprep.subr.mxu0 0.0
    %697 = vmatpush1.msra.mxu0 0.0
    %698 = vmatprep.subr.mxu0 0.0
    %699 = vmatpush1.msra.mxu0 0.0
    %700 = vmatprep.subr.mxu0 0.0
    %701 = vmatpush1.msra.mxu0 0.0
    %702 = vmatprep.subr.mxu0 0.0
    %703 = vmatpush1.msra.mxu0 0.0
    %704 = vmatprep.subr.mxu0 0.0
    %705 = vmatpush1.msra.mxu0 0.0
    %706 = vmatprep.subr.mxu0 0.0
    %707 = vmatpush1.msra.mxu0 0.0
    %708 = vmatprep.subr.mxu0 0.0
    %709 = vmatpush1.msra.mxu0 0.0
    %710 = vmatprep.subr.mxu0 0.0
    %711 = vmatpush1.msra.mxu0 0.0
    %712 = vmatprep.subr.mxu0 0.0
    %713 = vmatpush1.msra.mxu0 0.0
    %714 = vmatprep.subr.mxu0 0.0
    %715 = vmatpush1.msra.mxu0 0.0
    %716 = vmatprep.subr.mxu0 0.0
    %717 = vmatpush1.msra.mxu0 0.0
    %718 = vmatprep.subr.mxu0 0.0
    %719 = vmatpush1.msra.mxu0 0.0
    %720 = vmatprep.subr.mxu0 0.0
    %721 = vmatpush1.msra.mxu0 0.0
    %722 = vmatprep.subr.mxu0 0.0
    %723 = vmatpush1.msra.mxu0 0.0
    %724 = vmatprep.subr.mxu0 0.0
    %725 = vmatpush1.msra.mxu0 0.0
    %726 = vmatprep.subr.mxu0 0.0
    %727 = vmatpush1.msra.mxu0 0.0
    %728 = vmatprep.subr.mxu0 0.0
    %729 = vmatpush1.msra.mxu0 0.0
    %730 = vmatprep.subr.mxu0 0.0
    %731 = vmatpush1.msra.mxu0 0.0
    %732 = vmatprep.subr.mxu0 0.0
    %733 = vmatpush1.msra.mxu0 0.0
    %734 = vmatprep.subr.mxu0 0.0
    %735 = vmatpush1.msra.mxu0 0.0
    %736 = vmatprep.subr.mxu0 0.0
    %737 = vmatpush1.msra.mxu0 0.0
    %738 = vmatprep.subr.mxu0 0.0
    %739 = vmatpush1.msra.mxu0 0.0
    %740 = vmatprep.mubr.f32.mxu0 0.0
    %741 = vmatmul.mubr.f32.gmra.mrb[0].mxu0 %v364
    %v742 = vpop.f32.mrb[0].mxu0
    %v743 = vadd.f32 0.0, %v742
    %v744 = vpop.f32.mrb[0].mxu0
    %745 = vdwg.mxu0
    %v746 = vadd.f32 %v675, %v743
    %v747 = vxor.u32 %v746, 2147483648
    %v748 = vmul.f32 %v747, 1.442695
    %v749 = vpow.pop %v748
    %v750 = vadd.f32 %v749, 1.0
    %v751 = vrcp.pop %v750
    %v752 = vmul.f32 1.0, %v751
    %v753 = vtanh.pop %v746
    %v754 = vmul.f32 %v752, 0.0
    %756 = vrot.lane.b32.xlu0 %v753, 64
    %v757 = vpop.permute.xlu0 %756
    %v759 = vmul.f32 %v752, %v757
    %761 = vrot.lane.b32.xlu0 %v759, 32
    %v762 = vpop.permute.xlu0 %761
    %v764 = vadd.f32 %v754, %v762
    %v765 = vtanh.pop %v764
    %767 = vrot.lane.b32.xlu0 %v765, 64
    %v768 = vpop.permute.xlu0 %767
    %v770 = vmul.f32 %v752, %v768
    %v771 = vld [vmem:[#allocation2] sm:$0xff]
    %773 = vrot.lane.b32.xlu0 %v770, 32
    %v774 = vpop.permute.xlu0 %773
    %v776 = vadd.f32 %v771, %v774
    %777 = vst.msk [vmem:[#allocation2] sm:$0xff] %vm259, %v776
    %v778 = vld [vmem:[%s468] sm:$0xff]
    %v779 = vsel %vm259, %v774, 0
    %781 = vmatprep.subr.mxu0 0.0
    %782 = vmatpush1.msra.mxu0 %v576
    %783 = vmatprep.subr.mxu0 0.0
    %784 = vmatpush1.msra.mxu0 %v577
    %785 = vmatprep.subr.mxu0 0.0
    %786 = vmatpush1.msra.mxu0 %v578
    %787 = vmatprep.subr.mxu0 0.0
    %788 = vmatpush1.msra.mxu0 %v579
    %789 = vmatprep.subr.mxu0 0.0
    %790 = vmatpush1.msra.mxu0 0.0
    %791 = vmatprep.subr.mxu0 0.0
    %792 = vmatpush1.msra.mxu0 0.0
    %793 = vmatprep.subr.mxu0 0.0
    %794 = vmatpush1.msra.mxu0 0.0
    %795 = vmatprep.subr.mxu0 0.0
    %796 = vmatpush1.msra.mxu0 0.0
    %797 = vmatprep.subr.mxu0 0.0
    %798 = vmatpush1.msra.mxu0 0.0
    %799 = vmatprep.subr.mxu0 0.0
    %800 = vmatpush1.msra.mxu0 0.0
    %801 = vmatprep.subr.mxu0 0.0
    %802 = vmatpush1.msra.mxu0 0.0
    %803 = vmatprep.subr.mxu0 0.0
    %804 = vmatpush1.msra.mxu0 0.0
    %805 = vmatprep.subr.mxu0 0.0
    %806 = vmatpush1.msra.mxu0 0.0
    %807 = vmatprep.subr.mxu0 0.0
    %808 = vmatpush1.msra.mxu0 0.0
    %809 = vmatprep.subr.mxu0 0.0
    %810 = vmatpush1.msra.mxu0 0.0
    %811 = vmatprep.subr.mxu0 0.0
    %812 = vmatpush1.msra.mxu0 0.0
    %813 = vmatprep.subr.mxu0 0.0
    %814 = vmatpush1.msra.mxu0 0.0
    %815 = vmatprep.subr.mxu0 0.0
    %816 = vmatpush1.msra.mxu0 0.0
    %817 = vmatprep.subr.mxu0 0.0
    %818 = vmatpush1.msra.mxu0 0.0
    %819 = vmatprep.subr.mxu0 0.0
    %820 = vmatpush1.msra.mxu0 0.0
    %821 = vmatprep.subr.mxu0 0.0
    %822 = vmatpush1.msra.mxu0 0.0
    %823 = vmatprep.subr.mxu0 0.0
    %824 = vmatpush1.msra.mxu0 0.0
    %825 = vmatprep.subr.mxu0 0.0
    %826 = vmatpush1.msra.mxu0 0.0
    %827 = vmatprep.subr.mxu0 0.0
    %828 = vmatpush1.msra.mxu0 0.0
    %829 = vmatprep.subr.mxu0 0.0
    %830 = vmatpush1.msra.mxu0 0.0
    %831 = vmatprep.subr.mxu0 0.0
    %832 = vmatpush1.msra.mxu0 0.0
    %833 = vmatprep.subr.mxu0 0.0
    %834 = vmatpush1.msra.mxu0 0.0
    %835 = vmatprep.subr.mxu0 0.0
    %836 = vmatpush1.msra.mxu0 0.0
    %837 = vmatprep.subr.mxu0 0.0
    %838 = vmatpush1.msra.mxu0 0.0
    %839 = vmatprep.subr.mxu0 0.0
    %840 = vmatpush1.msra.mxu0 0.0
    %841 = vmatprep.subr.mxu0 0.0
    %842 = vmatpush1.msra.mxu0 0.0
    %843 = vmatprep.subr.mxu0 0.0
    %844 = vmatpush1.msra.mxu0 0.0
    %845 = vmatprep.mubr.f32.mxu0 0.0
    %846 = vmatmul.mubr.f32.gmra.mrb[0].mxu0 %v779
    %v847 = vpop.f32.mrb[0].mxu0
    %v848 = vadd.f32 0.0, %v847
    %v849 = vpop.f32.mrb[0].mxu0
    %850 = vdwg.mxu0
    %v851 = vadd.f32 %v778, %v848
    %v852 = vxor.u32 %v851, 2147483648
    %v853 = vmul.f32 %v852, 1.442695
    %v854 = vpow.pop %v853
    %v855 = vadd.f32 %v854, 1.0
    %v856 = vrcp.pop %v855
    %v857 = vmul.f32 1.0, %v856
    %v858 = vtanh.pop %v851
    %v859 = vmul.f32 %v857, %v764
    %861 = vrot.lane.b32.xlu0 %v858, 64
    %v862 = vpop.permute.xlu0 %861
    %v864 = vmul.f32 %v857, %v862
    %866 = vrot.lane.b32.xlu0 %v864, 32
    %v867 = vpop.permute.xlu0 %866
    %v869 = vadd.f32 %v859, %v867
    %v870 = vtanh.pop %v869
    %872 = vrot.lane.b32.xlu0 %v870, 64
    %v873 = vpop.permute.xlu0 %872
    %v875 = vmul.f32 %v857, %v873
    %v876 = vld [vmem:[%s567] sm:$0xff]
    %878 = vrot.lane.b32.xlu0 %v875, 32
    %v879 = vpop.permute.xlu0 %878
    %v881 = vadd.f32 %v876, %v879
    %882 = vst.msk [vmem:[%s567] sm:$0xff] %vm259, %v881
    %v883 = vld [vmem:[#allocation14] sm:$0x1]
    %v884 = vld [vmem:[#allocation12] sm:$0xff]
    %v885 = vld [vmem:[#allocation12 + $0x8] sm:$0xff]
    %v886 = vld [vmem:[#allocation12 + $0x10] sm:$0xff]
    %v887 = vld [vmem:[#allocation12 + $0x18] sm:$0xff]
    %v888 = vld [vmem:[#allocation2] sm:$0xff]
    %v889 = vld [vmem:[#allocation2 + $0x8] sm:$0xff]
    %v890 = vld [vmem:[#allocation11] sm:$0xff]
    %v891 = vld [vmem:[#allocation11 + $0x8] sm:$0xff]
    %v892 = vld [vmem:[#allocation11 + $0x10] sm:$0xff]
    %v893 = vld [vmem:[#allocation11 + $0x18] sm:$0xff]
    %v895 = vlaneseq
    %v896 = vshrl.u32 %v895, 7
    %v897 = vsub.s32 0, %v896
    %v898 = vrot.slane %v883, %v897
    %v901 = vsel %vm259, %v888, 0
    %v904 = vsel %vm259, %v889, 0
    %906 = vmatprep.subr.mxu0 0.0
    %907 = vmatpush1.msra.mxu0 %v890
    %908 = vmatprep.subr.mxu0 0.0
    %909 = vmatpush1.msra.mxu0 %v891
    %910 = vmatprep.subr.mxu0 0.0
    %911 = vmatpush1.msra.mxu0 %v892
    %912 = vmatprep.subr.mxu0 0.0
    %913 = vmatpush1.msra.mxu0 %v893
    %914 = vmatprep.subr.mxu0 0.0
    %915 = vmatpush1.msra.mxu0 0.0
    %916 = vmatprep.subr.mxu0 0.0
    %917 = vmatpush1.msra.mxu0 0.0
    %918 = vmatprep.subr.mxu0 0.0
    %919 = vmatpush1.msra.mxu0 0.0
    %920 = vmatprep.subr.mxu0 0.0
    %921 = vmatpush1.msra.mxu0 0.0
    %922 = vmatprep.subr.mxu0 0.0
    %923 = vmatpush1.msra.mxu0 0.0
    %924 = vmatprep.subr.mxu0 0.0
    %925 = vmatpush1.msra.mxu0 0.0
    %926 = vmatprep.subr.mxu0 0.0
    %927 = vmatpush1.msra.mxu0 0.0
    %928 = vmatprep.subr.mxu0 0.0
    %929 = vmatpush1.msra.mxu0 0.0
    %930 = vmatprep.subr.mxu0 0.0
    %931 = vmatpush1.msra.mxu0 0.0
    %932 = vmatprep.subr.mxu0 0.0
    %933 = vmatpush1.msra.mxu0 0.0
    %934 = vmatprep.subr.mxu0 0.0
    %935 = vmatpush1.msra.mxu0 0.0
    %936 = vmatprep.subr.mxu0 0.0
    %937 = vmatpush1.msra.mxu0 0.0
    %938 = vmatprep.subr.mxu0 0.0
    %939 = vmatpush1.msra.mxu0 0.0
    %940 = vmatprep.subr.mxu0 0.0
    %941 = vmatpush1.msra.mxu0 0.0
    %942 = vmatprep.subr.mxu0 0.0
    %943 = vmatpush1.msra.mxu0 0.0
    %944 = vmatprep.subr.mxu0 0.0
    %945 = vmatpush1.msra.mxu0 0.0
    %946 = vmatprep.subr.mxu0 0.0
    %947 = vmatpush1.msra.mxu0 0.0
    %948 = vmatprep.subr.mxu0 0.0
    %949 = vmatpush1.msra.mxu0 0.0
    %950 = vmatprep.subr.mxu0 0.0
    %951 = vmatpush1.msra.mxu0 0.0
    %952 = vmatprep.subr.mxu0 0.0
    %953 = vmatpush1.msra.mxu0 0.0
    %954 = vmatprep.subr.mxu0 0.0
    %955 = vmatpush1.msra.mxu0 0.0
    %956 = vmatprep.subr.mxu0 0.0
    %957 = vmatpush1.msra.mxu0 0.0
    %958 = vmatprep.subr.mxu0 0.0
    %959 = vmatpush1.msra.mxu0 0.0
    %960 = vmatprep.subr.mxu0 0.0
    %961 = vmatpush1.msra.mxu0 0.0
    %962 = vmatprep.subr.mxu0 0.0
    %963 = vmatpush1.msra.mxu0 0.0
    %964 = vmatprep.subr.mxu0 0.0
    %965 = vmatpush1.msra.mxu0 0.0
    %966 = vmatprep.subr.mxu0 0.0
    %967 = vmatpush1.msra.mxu0 0.0
    %968 = vmatprep.subr.mxu0 0.0
    %969 = vmatpush1.msra.mxu0 0.0
    %970 = vmatprep.mubr.f32.mxu0 0.0
    %971 = vmatmul.mubr.f32.gmra.mrb[0].mxu0 %v901
    %v972 = vpop.f32.mrb[0].mxu0
    %v973 = vadd.f32 %v898, %v972
    %v974 = vpop.f32.mrb[0].mxu0
    %975 = vmatprep.mubr.f32.mxu0 0.0
    %976 = vmatmul.mubr.f32.gmra.mrb[0].mxu0 %v904
    %v977 = vpop.f32.mrb[0].mxu0
    %v978 = vadd.f32 %v898, %v977
    %v979 = vpop.f32.mrb[0].mxu0
    %980 = vdwg.mxu0
    %981 = vst [vmem:[#allocation3] sm:$0xff] %v973
    %982 = vst [vmem:[#allocation3 + $0x8] sm:$0xff] %v978
    %v983 = vld [vmem:[#allocation3] sm:$0xff]
    %984 = vmatprep.subr.mxu0 0.0
    %985 = vmatpush1.msra.mxu0 %v884
    %986 = vmatprep.subr.mxu0 0.0
    %987 = vmatpush1.msra.mxu0 %v885
    %988 = vmatprep.subr.mxu0 0.0
    %989 = vmatpush1.msra.mxu0 %v886
    %990 = vmatprep.subr.mxu0 0.0
    %991 = vmatpush1.msra.mxu0 %v887
    %992 = vmatprep.subr.mxu0 0.0
    %993 = vmatpush1.msra.mxu0 0.0
    %994 = vmatprep.subr.mxu0 0.0
    %995 = vmatpush1.msra.mxu0 0.0
    %996 = vmatprep.subr.mxu0 0.0
    %997 = vmatpush1.msra.mxu0 0.0
    %998 = vmatprep.subr.mxu0 0.0
    %999 = vmatpush1.msra.mxu0 0.0
    %1000 = vmatprep.subr.mxu0 0.0
    %1001 = vmatpush1.msra.mxu0 0.0
    %1002 = vmatprep.subr.mxu0 0.0
    %1003 = vmatpush1.msra.mxu0 0.0
    %1004 = vmatprep.subr.mxu0 0.0
    %1005 = vmatpush1.msra.mxu0 0.0
    %1006 = vmatprep.subr.mxu0 0.0
    %1007 = vmatpush1.msra.mxu0 0.0
    %1008 = vmatprep.subr.mxu0 0.0
    %1009 = vmatpush1.msra.mxu0 0.0
    %1010 = vmatprep.subr.mxu0 0.0
    %1011 = vmatpush1.msra.mxu0 0.0
    %1012 = vmatprep.subr.mxu0 0.0
    %1013 = vmatpush1.msra.mxu0 0.0
    %1014 = vmatprep.subr.mxu0 0.0
    %1015 = vmatpush1.msra.mxu0 0.0
    %1016 = vmatprep.subr.mxu0 0.0
    %1017 = vmatpush1.msra.mxu0 0.0
    %1018 = vmatprep.subr.mxu0 0.0
    %1019 = vmatpush1.msra.mxu0 0.0
    %1020 = vmatprep.subr.mxu0 0.0
    %1021 = vmatpush1.msra.mxu0 0.0
    %1022 = vmatprep.subr.mxu0 0.0
    %1023 = vmatpush1.msra.mxu0 0.0
    %1024 = vmatprep.subr.mxu0 0.0
    %1025 = vmatpush1.msra.mxu0 0.0
    %1026 = vmatprep.subr.mxu0 0.0
    %1027 = vmatpush1.msra.mxu0 0.0
    %1028 = vmatprep.subr.mxu0 0.0
    %1029 = vmatpush1.msra.mxu0 0.0
    %1030 = vmatprep.subr.mxu0 0.0
    %1031 = vmatpush1.msra.mxu0 0.0
    %1032 = vmatprep.subr.mxu0 0.0
    %1033 = vmatpush1.msra.mxu0 0.0
    %1034 = vmatprep.subr.mxu0 0.0
    %1035 = vmatpush1.msra.mxu0 0.0
    %1036 = vmatprep.subr.mxu0 0.0
    %1037 = vmatpush1.msra.mxu0 0.0
    %1038 = vmatprep.subr.mxu0 0.0
    %1039 = vmatpush1.msra.mxu0 0.0
    %1040 = vmatprep.subr.mxu0 0.0
    %1041 = vmatpush1.msra.mxu0 0.0
    %1042 = vmatprep.subr.mxu0 0.0
    %1043 = vmatpush1.msra.mxu0 0.0
    %1044 = vmatprep.subr.mxu0 0.0
    %1045 = vmatpush1.msra.mxu0 0.0
    %1046 = vmatprep.subr.mxu0 0.0
    %1047 = vmatpush1.msra.mxu0 0.0
    %1048 = vmatprep.mubr.f32.mxu0 0.0
    %1049 = vmatmul.mubr.f32.gmra.mrb[0].mxu0 %v364
    %v1050 = vpop.f32.mrb[0].mxu0
    %v1051 = vadd.f32 0.0, %v1050
    %v1052 = vpop.f32.mrb[0].mxu0
    %1053 = vdwg.mxu0
    %v1054 = vadd.f32 %v983, %v1051
    %v1055 = vxor.u32 %v1054, 2147483648
    %v1056 = vmul.f32 %v1055, 1.442695
    %v1057 = vpow.pop %v1056
    %v1058 = vadd.f32 %v1057, 1.0
    %v1059 = vrcp.pop %v1058
    %v1060 = vmul.f32 1.0, %v1059
    %v1061 = vtanh.pop %v1054
    %v1062 = vmul.f32 %v1060, 0.0
    %1064 = vrot.lane.b32.xlu0 %v1061, 64
    %v1065 = vpop.permute.xlu0 %1064
    %v1067 = vmul.f32 %v1060, %v1065
    %1069 = vrot.lane.b32.xlu0 %v1067, 32
    %v1070 = vpop.permute.xlu0 %1069
    %v1072 = vadd.f32 %v1062, %v1070
    %v1073 = vtanh.pop %v1072
    %1075 = vrot.lane.b32.xlu0 %v1073, 64
    %v1076 = vpop.permute.xlu0 %1075
    %v1078 = vmul.f32 %v1060, %v1076
    %v1079 = vld [vmem:[#allocation2] sm:$0xff]
    %1081 = vrot.lane.b32.xlu0 %v1078, 32
    %v1082 = vpop.permute.xlu0 %1081
    %v1084 = vadd.f32 %v1079, %v1082
    %1085 = vst.msk [vmem:[#allocation2] sm:$0xff] %vm259, %v1084
    %v1086 = vld [vmem:[%s468] sm:$0xff]
    %v1087 = vsel %vm259, %v1082, 0
    %1089 = vmatprep.subr.mxu0 0.0
    %1090 = vmatpush1.msra.mxu0 %v884
    %1091 = vmatprep.subr.mxu0 0.0
    %1092 = vmatpush1.msra.mxu0 %v885
    %1093 = vmatprep.subr.mxu0 0.0
    %1094 = vmatpush1.msra.mxu0 %v886
    %1095 = vmatprep.subr.mxu0 0.0
    %1096 = vmatpush1.msra.mxu0 %v887
    %1097 = vmatprep.subr.mxu0 0.0
    %1098 = vmatpush1.msra.mxu0 0.0
    %1099 = vmatprep.subr.mxu0 0.0
    %1100 = vmatpush1.msra.mxu0 0.0
    %1101 = vmatprep.subr.mxu0 0.0
    %1102 = vmatpush1.msra.mxu0 0.0
    %1103 = vmatprep.subr.mxu0 0.0
    %1104 = vmatpush1.msra.mxu0 0.0
    %1105 = vmatprep.subr.mxu0 0.0
    %1106 = vmatpush1.msra.mxu0 0.0
    %1107 = vmatprep.subr.mxu0 0.0
    %1108 = vmatpush1.msra.mxu0 0.0
    %1109 = vmatprep.subr.mxu0 0.0
    %1110 = vmatpush1.msra.mxu0 0.0
    %1111 = vmatprep.subr.mxu0 0.0
    %1112 = vmatpush1.msra.mxu0 0.0
    %1113 = vmatprep.subr.mxu0 0.0
    %1114 = vmatpush1.msra.mxu0 0.0
    %1115 = vmatprep.subr.mxu0 0.0
    %1116 = vmatpush1.msra.mxu0 0.0
    %1117 = vmatprep.subr.mxu0 0.0
    %1118 = vmatpush1.msra.mxu0 0.0
    %1119 = vmatprep.subr.mxu0 0.0
    %1120 = vmatpush1.msra.mxu0 0.0
    %1121 = vmatprep.subr.mxu0 0.0
    %1122 = vmatpush1.msra.mxu0 0.0
    %1123 = vmatprep.subr.mxu0 0.0
    %1124 = vmatpush1.msra.mxu0 0.0
    %1125 = vmatprep.subr.mxu0 0.0
    %1126 = vmatpush1.msra.mxu0 0.0
    %1127 = vmatprep.subr.mxu0 0.0
    %1128 = vmatpush1.msra.mxu0 0.0
    %1129 = vmatprep.subr.mxu0 0.0
    %1130 = vmatpush1.msra.mxu0 0.0
    %1131 = vmatprep.subr.mxu0 0.0
    %1132 = vmatpush1.msra.mxu0 0.0
    %1133 = vmatprep.subr.mxu0 0.0
    %1134 = vmatpush1.msra.mxu0 0.0
    %1135 = vmatprep.subr.mxu0 0.0
    %1136 = vmatpush1.msra.mxu0 0.0
    %1137 = vmatprep.subr.mxu0 0.0
    %1138 = vmatpush1.msra.mxu0 0.0
    %1139 = vmatprep.subr.mxu0 0.0
    %1140 = vmatpush1.msra.mxu0 0.0
    %1141 = vmatprep.subr.mxu0 0.0
    %1142 = vmatpush1.msra.mxu0 0.0
    %1143 = vmatprep.subr.mxu0 0.0
    %1144 = vmatpush1.msra.mxu0 0.0
    %1145 = vmatprep.subr.mxu0 0.0
    %1146 = vmatpush1.msra.mxu0 0.0
    %1147 = vmatprep.subr.mxu0 0.0
    %1148 = vmatpush1.msra.mxu0 0.0
    %1149 = vmatprep.subr.mxu0 0.0
    %1150 = vmatpush1.msra.mxu0 0.0
    %1151 = vmatprep.subr.mxu0 0.0
    %1152 = vmatpush1.msra.mxu0 0.0
    %1153 = vmatprep.mubr.f32.mxu0 0.0
    %1154 = vmatmul.mubr.f32.gmra.mrb[0].mxu0 %v1087
    %v1155 = vpop.f32.mrb[0].mxu0
    %v1156 = vadd.f32 0.0, %v1155
    %v1157 = vpop.f32.mrb[0].mxu0
    %1158 = vdwg.mxu0
    %v1159 = vadd.f32 %v1086, %v1156
    %v1160 = vxor.u32 %v1159, 2147483648
    %v1161 = vmul.f32 %v1160, 1.442695
    %v1162 = vpow.pop %v1161
    %v1163 = vadd.f32 %v1162, 1.0
    %v1164 = vrcp.pop %v1163
    %v1165 = vmul.f32 1.0, %v1164
    %v1166 = vtanh.pop %v1159
    %v1167 = vmul.f32 %v1165, %v1072
    %1169 = vrot.lane.b32.xlu0 %v1166, 64
    %v1170 = vpop.permute.xlu0 %1169
    %v1172 = vmul.f32 %v1165, %v1170
    %1174 = vrot.lane.b32.xlu0 %v1172, 32
    %v1175 = vpop.permute.xlu0 %1174
    %v1177 = vadd.f32 %v1167, %v1175
    %v1178 = vtanh.pop %v1177
    %1180 = vrot.lane.b32.xlu0 %v1178, 64
    %v1181 = vpop.permute.xlu0 %1180
    %v1183 = vmul.f32 %v1165, %v1181
    %v1184 = vld [vmem:[%s567] sm:$0xff]
    %1186 = vrot.lane.b32.xlu0 %v1183, 32
    %v1187 = vpop.permute.xlu0 %1186
    %v1189 = vadd.f32 %v1184, %v1187
    %1190 = vst.msk [vmem:[%s567] sm:$0xff] %vm259, %v1189
    %v1191 = vld [vmem:[#allocation2] sm:$0xff]
    %v1192 = vld [vmem:[#allocation2 + $0x8] sm:$0xff]
    %v1193 = vld [vmem:[#allocation15] sm:$0xff]
    %v1194 = vld [vmem:[#allocation15 + $0x8] sm:$0xff]
    %v1195 = vld [vmem:[#allocation15 + $0x10] sm:$0xff]
    %v1196 = vld [vmem:[#allocation15 + $0x18] sm:$0xff]
    %v1197 = vld [vmem:[#allocation17] sm:$0x1]
    %v1199 = vlaneseq
    %v1200 = vshrl.u32 %v1199, 7
    %v1201 = vsub.s32 0, %v1200
    %v1202 = vrot.slane %v1197, %v1201
    %v1205 = vsel %vm259, %v1191, 0
    %v1208 = vsel %vm259, %v1192, 0
    %1210 = vmatprep.subr.mxu0 0.0
    %1211 = vmatpush1.msra.mxu0 %v1193
    %1212 = vmatprep.subr.mxu0 0.0
    %1213 = vmatpush1.msra.mxu0 %v1194
    %1214 = vmatprep.subr.mxu0 0.0
    %1215 = vmatpush1.msra.mxu0 %v1195
    %1216 = vmatprep.subr.mxu0 0.0
    %1217 = vmatpush1.msra.mxu0 %v1196
    %1218 = vmatprep.subr.mxu0 0.0
    %1219 = vmatpush1.msra.mxu0 0.0
    %1220 = vmatprep.subr.mxu0 0.0
    %1221 = vmatpush1.msra.mxu0 0.0
    %1222 = vmatprep.subr.mxu0 0.0
    %1223 = vmatpush1.msra.mxu0 0.0
    %1224 = vmatprep.subr.mxu0 0.0
    %1225 = vmatpush1.msra.mxu0 0.0
    %1226 = vmatprep.subr.mxu0 0.0
    %1227 = vmatpush1.msra.mxu0 0.0
    %1228 = vmatprep.subr.mxu0 0.0
    %1229 = vmatpush1.msra.mxu0 0.0
    %1230 = vmatprep.subr.mxu0 0.0
    %1231 = vmatpush1.msra.mxu0 0.0
    %1232 = vmatprep.subr.mxu0 0.0
    %1233 = vmatpush1.msra.mxu0 0.0
    %1234 = vmatprep.subr.mxu0 0.0
    %1235 = vmatpush1.msra.mxu0 0.0
    %1236 = vmatprep.subr.mxu0 0.0
    %1237 = vmatpush1.msra.mxu0 0.0
    %1238 = vmatprep.subr.mxu0 0.0
    %1239 = vmatpush1.msra.mxu0 0.0
    %1240 = vmatprep.subr.mxu0 0.0
    %1241 = vmatpush1.msra.mxu0 0.0
    %1242 = vmatprep.subr.mxu0 0.0
    %1243 = vmatpush1.msra.mxu0 0.0
    %1244 = vmatprep.subr.mxu0 0.0
    %1245 = vmatpush1.msra.mxu0 0.0
    %1246 = vmatprep.subr.mxu0 0.0
    %1247 = vmatpush1.msra.mxu0 0.0
    %1248 = vmatprep.subr.mxu0 0.0
    %1249 = vmatpush1.msra.mxu0 0.0
    %1250 = vmatprep.subr.mxu0 0.0
    %1251 = vmatpush1.msra.mxu0 0.0
    %1252 = vmatprep.subr.mxu0 0.0
    %1253 = vmatpush1.msra.mxu0 0.0
    %1254 = vmatprep.subr.mxu0 0.0
    %1255 = vmatpush1.msra.mxu0 0.0
    %1256 = vmatprep.subr.mxu0 0.0
    %1257 = vmatpush1.msra.mxu0 0.0
    %1258 = vmatprep.subr.mxu0 0.0
    %1259 = vmatpush1.msra.mxu0 0.0
    %1260 = vmatprep.subr.mxu0 0.0
    %1261 = vmatpush1.msra.mxu0 0.0
    %1262 = vmatprep.subr.mxu0 0.0
    %1263 = vmatpush1.msra.mxu0 0.0
    %1264 = vmatprep.subr.mxu0 0.0
    %1265 = vmatpush1.msra.mxu0 0.0
    %1266 = vmatprep.subr.mxu0 0.0
    %1267 = vmatpush1.msra.mxu0 0.0
    %1268 = vmatprep.subr.mxu0 0.0
    %1269 = vmatpush1.msra.mxu0 0.0
    %1270 = vmatprep.subr.mxu0 0.0
    %1271 = vmatpush1.msra.mxu0 0.0
    %1272 = vmatprep.subr.mxu0 0.0
    %1273 = vmatpush1.msra.mxu0 0.0
    %1274 = vmatprep.mubr.f32.mxu0 0.0
    %1275 = vmatmul.mubr.f32.gmra.mrb[0].mxu0 %v1205
    %v1276 = vpop.f32.mrb[0].mxu0
    %v1277 = vadd.f32 %v1202, %v1276
    %v1278 = vpop.f32.mrb[0].mxu0
    %1279 = vmatprep.mubr.f32.mxu0 0.0
    %1280 = vmatmul.mubr.f32.gmra.mrb[0].mxu0 %v1208
    %v1281 = vpop.f32.mrb[0].mxu0
    %v1282 = vadd.f32 %v1202, %v1281
    %v1283 = vpop.f32.mrb[0].mxu0
    %1284 = vdwg.mxu0
    %1285 = vst [vmem:[%s14] sm:$0xff] %v1277
    %1286 = vst [vmem:[%s14 + $0x8] sm:$0xff] %v1282
    // Predicated region
    $region94: #{lstm_model_forward.1} parent=1 // pred_check
      _
    $region95: #{lstm_model_forward.1} parent=1 // pred_check_branch
      %1288 = sbr.rel (0) target = $region97
    $region96: #{lstm_model_forward.1} parent=1 // pred_region
      _
    $region97: #{lstm_model_forward.1} parent=1 // pred_fallthru
      _
    // Predicated region
    $region98: #{lstm_model_forward.1} parent=1 // pred_check
      _
    $region99: #{lstm_model_forward.1} parent=1 // pred_check_branch
      %1290 = sbr.rel (0) target = $region101
    $region100: #{lstm_model_forward.1} parent=1 // pred_region
      _
    $region101: #{lstm_model_forward.1} parent=1 // pred_fallthru
      _
    %1291 = vsyncpa [#allocation5], 1
    %1292 = vsyncpa [#allocation7], 1
    %1293 = vsyncpa [#allocation10], 1
    %1294 = vsyncpa [#allocation13], 1
    %1295 = vsyncpa [#allocation16], 1

</llo_original>
